<compile_context>
chip_gen: v6e
topology: v6e:2x2x1
jax: 0.10.0
libtpu: 0.0.40
codegen_flags: <defaults>
</compile_context>

<pallas_src>
import functools
import math

import jax
import jax.numpy as jnp
import numpy as np
from jax import lax
from jax.experimental import pallas as pl
from jax.experimental.pallas import tpu as pltpu


def _round_up(v, m):
    return ((v + m - 1) // m) * m


def _vmem_budget_bytes():
    """Generation-aware (scoped vmem_limit_bytes, working-set budget)."""
    try:
        cap = int(getattr(pltpu.get_tpu_info(), "vmem_capacity_bytes", 64 * 1024 * 1024))
    except Exception:  # trace-time query unavailable -> assume smallest (v7x) VMEM
        cap = 64 * 1024 * 1024
    limit = min((cap * 3) // 4, 100 * 1024 * 1024)   # ~48 MiB on v7x, ~96 MiB on v5e/v6e
    budget = (limit * 7) // 8                        # headroom for internal scratch
    return limit, budget


def _upsample_matrix_np(l_in, l_out, scale_factor):
    """Dense U (l_in, l_out) with v @ U == nn.Upsample(mode='linear',
    align_corners=False) along the last axis (PyTorch explicit-scale_factor path)."""
    scale = (1.0 / float(scale_factor)) if l_out > 1 else 0.0
    j = np.arange(l_out, dtype=np.float64)
    src = np.maximum(scale * (j + 0.5) - 0.5, 0.0)
    i0 = np.minimum(np.floor(src).astype(np.int64), l_in - 1)
    i1 = np.minimum(i0 + 1, l_in - 1)
    lam1 = src - i0
    lam0 = 1.0 - lam1
    u = np.zeros((l_in, l_out), dtype=np.float32)
    jj = j.astype(np.int64)
    np.add.at(u, (i0, jj), lam0)
    np.add.at(u, (i1, jj), lam1)
    return u


def _folded_up_conv_matrix(weight, l_in, l_up, l_pad, scale_factor):
    """A (C_in*L_in, C_out*l_pad) such that
         (x[n].reshape(C_in*L_in) @ A).reshape(C_out, l_pad)[:, :l_up]
       == Conv1d(padding='same', bias=None)(Upsample(linear)(x[n])).
       Columns in the [l_up, l_pad) lane-padding region are exactly zero."""
    c_out, c_in, k = weight.shape
    pad = (k - 1) // 2
    u = _upsample_matrix_np(l_in, l_up, scale_factor)                   # (l_in, l_up)
    u_full = np.zeros((l_in, l_up + 2 * pad), np.float32)
    u_full[:, pad:pad + l_up] = u
    taps = np.stack([u_full[:, kk:kk + l_up] for kk in range(k)], 0)    # (k, l_in, l_up)
    a = jnp.einsum('oik,kjl->ijol', weight.astype(jnp.float32), jnp.asarray(taps))
    a = a.reshape(c_in * l_in, c_out, l_up)
    a = jnp.pad(a, ((0, 0), (0, 0), (0, l_pad - l_up)))
    return a.reshape(c_in * l_in, c_out * l_pad)


def _channel_selector(c_out, l_up, l_pad, c_stat):
    """S (C_out*l_pad, c_stat): conv_flat @ S gives per-channel sums over the valid
    l_up positions (lane padding excluded); columns [c_out, c_stat) are zero so the
    lane-dense stats store carries no garbage."""
    s = np.zeros((c_out, l_pad, c_stat), np.float32)
    for c in range(c_out):
        s[c, :l_up, c] = 1.0
    return jnp.asarray(s.reshape(c_out * l_pad, c_stat))


def _const_spec(block_shape):
    """Grid-invariant operand: VMEM-resident, single-buffered when supported."""
    idx = lambda i: (0,) * len(block_shape)
    if hasattr(pl, "Buffered"):
        try:
            return pl.BlockSpec(block_shape, idx, pipeline_mode=pl.Buffered(1))
        except TypeError:
            pass
    return pl.BlockSpec(block_shape, idx)


def _stats_kernel(x_ref, a_ref, s_ref, stats_ref):
    # (NB, K_pad) bf16 @ (K_pad, C_out*L_pad) bf16 -> f32 on the MXU.  conv never
    # leaves VMEM: only per-channel partial (sum, sumsq) for this batch block do.
    conv = jnp.dot(x_ref[...], a_ref[...], preferred_element_type=jnp.float32)
    # f32 selector matmuls: keeps sum-of-squares precision for the E[x^2]-E[x]^2
    # variance (bf16 here would worsen cancellation for near-constant channels).
    sums = jnp.dot(conv, s_ref[...], preferred_element_type=jnp.float32)        # (NB, c_stat)
    sqs = jnp.dot(conv * conv, s_ref[...], preferred_element_type=jnp.float32)  # (NB, c_stat)
    stats_ref[0, 0:1, :] = jnp.sum(sums, axis=0, keepdims=True)
    stats_ref[0, 1:2, :] = jnp.sum(sqs, axis=0, keepdims=True)


def _bn_add_silu_kernel(x_ref, a_ref, feat_ref, aff_ref, out_ref):
    # Recompute conv = x @ A (cheaper than a 4B HBM round-trip of conv itself),
    # then fuse the BN affine, the feature add and SiLU.
    conv = jnp.dot(x_ref[...], a_ref[...], preferred_element_type=jnp.float32)
    y = conv * aff_ref[0:1, :] + aff_ref[1:2, :] + feat_ref[...].astype(jnp.float32)
    # SiLU with a single EUP op: sigmoid(y) == 0.5 * (1 + tanh(y / 2)).
    out_ref[...] = (0.5 * y * (1.0 + jnp.tanh(0.5 * y))).astype(out_ref.dtype)


def _choose_batch_block(n, k_pad, c_flat, c_stat, vmem_budget):
    # Resident single-buffered constants: A (bf16) + selector (f32) + affine rows (f32).
    resident = k_pad * c_flat * 2 + c_flat * c_stat * 4 + 2 * c_flat * 4
    # Per-batch-row VMEM of pass 2 (the larger pass): double-buffered x (bf16),
    # feature (bf16) and out (f32), plus the in-VMEM f32 conv value.
    per_row = 2 * (k_pad * 2) + 2 * (c_flat * 2) + 2 * (c_flat * 4) + c_flat * 4
    nb = max((vmem_budget - resident) // max(per_row, 1), 8)
    # Keep >=2 grid blocks when the batch allows so the "parallel" axis can shard
    # across v7x's two TensorCores.
    if n >= 32:
        nb = min(nb, _round_up(-(-n // 2), 16))
    # Never pad a tiny batch beyond a single sublane-aligned block.
    nb = min(nb, _round_up(n, 8), 1024)
    # Align: 128 (full MXU M tile) -> 16 (bf16 sublane pack) -> 8.
    for align in (128, 16, 8):
        if nb >= align:
            nb -= nb % align
            break
    return max(int(nb), 8)


def up_layer_forward(x, feature, weight, bias, gamma, beta, *, scale_factor, eps=1e-5):
    n, c_in, l_in = x.shape
    c_out, c_in_w, k_size = weight.shape
    assert c_in_w == c_in
    assert k_size % 2 == 1, "kernel_size assumed odd (same-length padding)"
    l_up = int(math.floor(l_in * scale_factor))
    assert feature.shape == (n, c_out, l_up)

    l_pad = _round_up(l_up, 128)            # lane-dense length
    k_flat = c_in * l_in
    k_pad = _round_up(k_flat, 128)          # tile-aligned contraction dim
    c_flat = c_out * l_pad
    c_stat = _round_up(c_out, 128)          # lane-dense stats channel dim

    vmem_limit, vmem_budget = _vmem_budget_bytes()

    a = _folded_up_conv_matrix(weight, l_in, l_up, l_pad, scale_factor)
    if k_pad != k_flat:
        a = jnp.pad(a, ((0, k_pad - k_flat), (0, 0)))   # zero K-padding rows
    a_bf = a.astype(jnp.bfloat16)
    if k_pad * c_flat * 2 > (2 * vmem_budget) // 3:
        # TODO(synk): stacked-tap (C_out, K*C_in) @ (K*C_in, L_up) fallback for shapes
        # where the fully folded upsample+conv matrix does not fit VMEM.
        raise NotImplementedError("folded upsample+conv matrix does not fit VMEM")
    sel = _channel_selector(c_out, l_up, l_pad, c_stat)

    nb = _choose_batch_block(n, k_pad, c_flat, c_stat, vmem_budget)
    n_blocks = -(-n // nb)
    n_pad = n_blocks * nb

    # bf16 BEFORE padding -> the wrapper-side pad copies move half the bytes.
    x_flat = x.reshape(n, k_flat).astype(jnp.bfloat16)
    if n_pad != n or k_pad != k_flat:
        # zero batch/K padding -> zero conv rows/contributions -> stats unaffected
        x_flat = jnp.pad(x_flat, ((0, n_pad - n), (0, k_pad - k_flat)))

    cp = pltpu.CompilerParams(dimension_semantics=("parallel",),
                              vmem_limit_bytes=vmem_limit)

    # -------- pass 1: per-block BN partial statistics (conv never hits HBM) --------
    stats = pl.pallas_call(
        _stats_kernel,
        out_shape=jax.ShapeDtypeStruct((n_blocks, 2, c_stat), jnp.float32),
        grid_spec=pltpu.PrefetchScalarGridSpec(
            num_scalar_prefetch=0,
            grid=(n_blocks,),
            in_specs=[
                pl.BlockSpec((nb, k_pad), lambda i: (i, 0)),   # x, per batch block
                _const_spec((k_pad, c_flat)),                  # folded upsample+conv
                _const_spec((c_flat, c_stat)),                 # channel-sum selector
            ],
            out_specs=pl.BlockSpec((1, 2, c_stat), lambda i: (i, 0, 0)),
        ),
        compiler_params=cp,
    )(x_flat, a_bf, sel)

    # -------- tiny JAX glue: finish the batch statistics ---------------------------
    # NOTE: the Conv1d bias cancels exactly under training-mode batch statistics
    #       (BN(c + b) == gamma*(c - mean(c))*rsqrt(var(c)+eps) + beta), so it is
    #       deliberately not added anywhere in this pipeline.
    # TODO(synk): eval-mode BatchNorm (running stats) is not implemented; it would
    #       need the conv bias plus stored running mean/var instead of batch stats.
    del bias
    cnt = float(n) * float(l_up)
    total = jnp.sum(stats, axis=0)[:, :c_out]                        # (2, c_out)
    mean = total[0] / cnt
    # E[x^2] - E[x]^2 can go slightly negative under cancellation; clamp before rsqrt.
    var = jnp.maximum(total[1] / cnt - mean * mean, 0.0)
    scale = gamma.astype(jnp.float32) * lax.rsqrt(var + eps)         # (c_out,)
    shift = beta.astype(jnp.float32) - mean * scale                  # (c_out,)
    affine = jnp.stack([scale, shift], axis=0)                       # (2, c_out)
    affine = jnp.broadcast_to(affine[:, :, None], (2, c_out, l_pad)).reshape(2, c_flat)

    feat_flat = feature.astype(jnp.bfloat16)
    if n_pad != n or l_pad != l_up:
        feat_flat = jnp.pad(feat_flat, ((0, n_pad - n), (0, 0), (0, l_pad - l_up)))
    feat_flat = feat_flat.reshape(n_pad, c_flat)

    # -------- pass 2: recompute conv, then BN affine + feature + SiLU --------------
    out_flat = pl.pallas_call(
        _bn_add_silu_kernel,
        out_shape=jax.ShapeDtypeStruct((n_pad, c_flat), jnp.float32),
        grid_spec=pltpu.PrefetchScalarGridSpec(
            num_scalar_prefetch=0,
            grid=(n_blocks,),
            in_specs=[
                pl.BlockSpec((nb, k_pad), lambda i: (i, 0)),   # x, per batch block
                _const_spec((k_pad, c_flat)),                  # folded upsample+conv
                pl.BlockSpec((nb, c_flat), lambda i: (i, 0)),  # feature
                _const_spec((2, c_flat)),                      # [scale; shift] rows
            ],
            out_specs=pl.BlockSpec((nb, c_flat), lambda i: (i, 0)),
        ),
        compiler_params=cp,
    )(x_flat, a_bf, feat_flat, affine)

    # NOTE: padded lanes/rows of out_flat hold SiLU(shift), not zeros; they are
    # sliced away here and must not be consumed directly in the padded layout.
    return out_flat.reshape(n_pad, c_out, l_pad)[:n, :, :l_up]


def up_layer_ref(x, feature, weight, bias, gamma, beta, *, scale_factor, eps=1e-5):
    """Pure-JAX f32 reference matching the PyTorch forward (training-mode BN)."""
    n, c_in, l_in = x.shape
    c_out, _, k_size = weight.shape
    pad = (k_size - 1) // 2
    l_up = int(math.floor(l_in * scale_factor))
    u = jnp.asarray(_upsample_matrix_np(l_in, l_up, scale_factor))
    xu = jnp.einsum('ncl,lm->ncm', x, u)
    xp = jnp.pad(xu, ((0, 0), (0, 0), (pad, pad)))
    conv = jnp.zeros((n, c_out, l_up), jnp.float32)
    for k in range(k_size):
        conv = conv + jnp.einsum('oi,nil->nol', weight[:, :, k], xp[:, :, k:k + l_up])
    conv = conv + bias[None, :, None]
    mean = jnp.mean(conv, axis=(0, 2), keepdims=True)
    var = jnp.mean((conv - mean) ** 2, axis=(0, 2), keepdims=True)
    y = gamma[None, :, None] * (conv - mean) / jnp.sqrt(var + eps) + beta[None, :, None]
    y = y + feature
    return y / (1.0 + jnp.exp(-y))


if __name__ == "__main__":
    key = jax.random.PRNGKey(0)
    kx, kf, kw, kb, kg, kbe = jax.random.split(key, 6)

    N, C_IN, C_OUT, L_IN, K, SCALE = 2, 4, 8, 16, 3, 2
    L_UP = L_IN * SCALE

    x = jax.random.normal(kx, (N, C_IN, L_IN), jnp.float32)
    feature = jax.random.normal(kf, (N, C_OUT, L_UP), jnp.float32)
    weight = 0.2 * jax.random.normal(kw, (C_OUT, C_IN, K), jnp.float32)
    bias = 0.1 * jax.random.normal(kb, (C_OUT,), jnp.float32)
    gamma = 1.0 + 0.1 * jax.random.normal(kg, (C_OUT,), jnp.float32)
    beta = 0.1 * jax.random.normal(kbe, (C_OUT,), jnp.float32)

    fwd = jax.jit(functools.partial(up_layer_forward, scale_factor=SCALE))
    out = jax.block_until_ready(fwd(x, feature, weight, bias, gamma, beta))

    ref = jax.block_until_ready(
        up_layer_ref(x, feature, weight, bias, gamma, beta, scale_factor=SCALE))

    # bf16 MXU operands (x, A, feature) vs the f32 reference -> relaxed tolerance.
    if not np.allclose(np.asarray(out), np.asarray(ref), atol=5e-2, rtol=5e-2):
        raise AssertionError("Pallas kernel does not match reference")
    print("KERNEL_OK")
</pallas_src>

<mosaic_0001>
module attributes {stable_mosaic.version = 11 : i64} {
  func.func @_stats_kernel(%arg0: i32, %arg1: memref<8x128xbf16, #tpu.memory_space<vmem>>, %arg2: memref<128x1024xbf16, #tpu.memory_space<vmem>>, %arg3: memref<1024x128xf32, #tpu.memory_space<vmem>>, %arg4: memref<1x2x128xf32, #tpu.memory_space<vmem>>) attributes {dimension_semantics = [#tpu.dimension_semantics<parallel>], iteration_bounds = array<i64: 1>, scalar_prefetch = 0 : i64, scratch_operands = 0 : i64, tpu.core_type = #tpu.core_type<tc>, window_params = [{transform_indices = @transform_0, window_bounds = array<i64: 8, 128>}, {pipeline_mode = #tpu.pipeline_mode<synchronous>, transform_indices = @transform_1, window_bounds = array<i64: 128, 1024>}, {pipeline_mode = #tpu.pipeline_mode<synchronous>, transform_indices = @transform_2, window_bounds = array<i64: 1024, 128>}, {transform_indices = @transform_3, window_bounds = array<i64: 1, 2, 128>}]} {
    %c0 = arith.constant 0 : index
    %c0_0 = arith.constant 0 : index
    %0 = vector.load %arg1[%c0, %c0_0] : memref<8x128xbf16, #tpu.memory_space<vmem>>, vector<8x128xbf16>
    %c0_1 = arith.constant 0 : index
    %c0_2 = arith.constant 0 : index
    %1 = vector.load %arg2[%c0_1, %c0_2] : memref<128x1024xbf16, #tpu.memory_space<vmem>>, vector<128x1024xbf16>
    %cst = arith.constant dense<0.000000e+00> : vector<8x1024xf32>
    %2 = tpu.matmul %0, %1, %cst {dimension_numbers = #tpu.dot_dimension_numbers<[1], [0], [0], [1], [0, 0, 1, 1], [], []>} : vector<8x128xbf16>, vector<128x1024xbf16>, vector<8x1024xf32> -> vector<8x1024xf32>
    %c0_3 = arith.constant 0 : index
    %c0_4 = arith.constant 0 : index
    %3 = vector.load %arg3[%c0_3, %c0_4] : memref<1024x128xf32, #tpu.memory_space<vmem>>, vector<1024x128xf32>
    %cst_5 = arith.constant dense<0.000000e+00> : vector<8x128xf32>
    %4 = tpu.matmul %2, %3, %cst_5 {dimension_numbers = #tpu.dot_dimension_numbers<[1], [0], [0], [1], [0, 0, 1, 1], [], []>} : vector<8x1024xf32>, vector<1024x128xf32>, vector<8x128xf32> -> vector<8x128xf32>
    %5 = arith.mulf %2, %2 : vector<8x1024xf32>
    %c0_6 = arith.constant 0 : index
    %c0_7 = arith.constant 0 : index
    %6 = vector.load %arg3[%c0_6, %c0_7] : memref<1024x128xf32, #tpu.memory_space<vmem>>, vector<1024x128xf32>
    %cst_8 = arith.constant dense<0.000000e+00> : vector<8x128xf32>
    %7 = tpu.matmul %5, %6, %cst_8 {dimension_numbers = #tpu.dot_dimension_numbers<[1], [0], [0], [1], [0, 0, 1, 1], [], []>} : vector<8x1024xf32>, vector<1024x128xf32>, vector<8x128xf32> -> vector<8x128xf32>
    %cst_9 = arith.constant dense<0.000000e+00> : vector<128xf32>
    %8 = vector.multi_reduction <add>, %4, %cst_9 [0] : vector<8x128xf32> to vector<128xf32>
    %9 = vector.shape_cast %8 : vector<128xf32> to vector<1x128xf32>
    %c0_10 = arith.constant 0 : index
    %c0_11 = arith.constant 0 : index
    %c0_12 = arith.constant 0 : index
    %10 = vector.load %arg4[%c0_10, %c0_11, %c0_12] : memref<1x2x128xf32, #tpu.memory_space<vmem>>, vector<1x1x128xf32>
    %11 = vector.shape_cast %10 : vector<1x1x128xf32> to vector<1x128xf32>
    %12 = vector.shape_cast %9 : vector<1x128xf32> to vector<1x1x128xf32>
    tpu.vector_store %arg4[%c0_10, %c0_11, %c0_12], %12 {strides = array<i32>} : memref<1x2x128xf32, #tpu.memory_space<vmem>>, vector<1x1x128xf32>,
    %cst_13 = arith.constant dense<0.000000e+00> : vector<128xf32>
    %13 = vector.multi_reduction <add>, %7, %cst_13 [0] : vector<8x128xf32> to vector<128xf32>
    %14 = vector.shape_cast %13 : vector<128xf32> to vector<1x128xf32>
    %c0_14 = arith.constant 0 : index
    %c1 = arith.constant 1 : index
    %c0_15 = arith.constant 0 : index
    %15 = vector.load %arg4[%c0_14, %c1, %c0_15] : memref<1x2x128xf32, #tpu.memory_space<vmem>>, vector<1x1x128xf32>
    %16 = vector.shape_cast %15 : vector<1x1x128xf32> to vector<1x128xf32>
    %17 = vector.shape_cast %14 : vector<1x128xf32> to vector<1x1x128xf32>
    tpu.vector_store %arg4[%c0_14, %c1, %c0_15], %17 {strides = array<i32>} : memref<1x2x128xf32, #tpu.memory_space<vmem>>, vector<1x1x128xf32>,
    return
  }
  func.func @transform_0(%arg0: i32) -> (i32, i32) {
    %c0_i32 = arith.constant 0 : i32
    %c0_i32_0 = arith.constant 0 : i32
    return %arg0, %c0_i32 : i32, i32
  }
  func.func @transform_1(%arg0: i32) -> (i32, i32) {
    %c0_i32 = arith.constant 0 : i32
    %c0_i32_0 = arith.constant 0 : i32
    %c0_i32_1 = arith.constant 0 : i32
    return %c0_i32, %c0_i32_0 : i32, i32
  }
  func.func @transform_2(%arg0: i32) -> (i32, i32) {
    %c0_i32 = arith.constant 0 : i32
    %c0_i32_0 = arith.constant 0 : i32
    %c0_i32_1 = arith.constant 0 : i32
    return %c0_i32, %c0_i32_0 : i32, i32
  }
  func.func @transform_3(%arg0: i32) -> (i32, i32, i32) {
    %c0_i32 = arith.constant 0 : i32
    %c0_i32_0 = arith.constant 0 : i32
    %c0_i32_1 = arith.constant 0 : i32
    return %arg0, %c0_i32, %c0_i32_0 : i32, i32, i32
  }
}

module attributes {stable_mosaic.version = 11 : i64} {
  func.func @_bn_add_silu_kernel(%arg0: i32, %arg1: memref<8x128xbf16, #tpu.memory_space<vmem>>, %arg2: memref<128x1024xbf16, #tpu.memory_space<vmem>>, %arg3: memref<8x1024xbf16, #tpu.memory_space<vmem>>, %arg4: memref<2x1024xf32, #tpu.memory_space<vmem>>, %arg5: memref<8x1024xf32, #tpu.memory_space<vmem>>) attributes {dimension_semantics = [#tpu.dimension_semantics<parallel>], iteration_bounds = array<i64: 1>, scalar_prefetch = 0 : i64, scratch_operands = 0 : i64, tpu.core_type = #tpu.core_type<tc>, window_params = [{transform_indices = @transform_0, window_bounds = array<i64: 8, 128>}, {pipeline_mode = #tpu.pipeline_mode<synchronous>, transform_indices = @transform_1, window_bounds = array<i64: 128, 1024>}, {transform_indices = @transform_2, window_bounds = array<i64: 8, 1024>}, {pipeline_mode = #tpu.pipeline_mode<synchronous>, transform_indices = @transform_3, window_bounds = array<i64: 2, 1024>}, {transform_indices = @transform_4, window_bounds = array<i64: 8, 1024>}]} {
    %c0 = arith.constant 0 : index
    %c0_0 = arith.constant 0 : index
    %0 = vector.load %arg1[%c0, %c0_0] : memref<8x128xbf16, #tpu.memory_space<vmem>>, vector<8x128xbf16>
    %c0_1 = arith.constant 0 : index
    %c0_2 = arith.constant 0 : index
    %1 = vector.load %arg2[%c0_1, %c0_2] : memref<128x1024xbf16, #tpu.memory_space<vmem>>, vector<128x1024xbf16>
    %cst = arith.constant dense<0.000000e+00> : vector<8x1024xf32>
    %2 = tpu.matmul %0, %1, %cst {dimension_numbers = #tpu.dot_dimension_numbers<[1], [0], [0], [1], [0, 0, 1, 1], [], []>} : vector<8x128xbf16>, vector<128x1024xbf16>, vector<8x1024xf32> -> vector<8x1024xf32>
    %c0_3 = arith.constant 0 : index
    %c0_4 = arith.constant 0 : index
    %3 = vector.load %arg4[%c0_3, %c0_4] : memref<2x1024xf32, #tpu.memory_space<vmem>>, vector<1x1024xf32>
    %4 = vector.broadcast %3 : vector<1x1024xf32> to vector<8x1024xf32>
    %5 = arith.mulf %2, %4 : vector<8x1024xf32>
    %c1 = arith.constant 1 : index
    %c0_5 = arith.constant 0 : index
    %6 = vector.load %arg4[%c1, %c0_5] : memref<2x1024xf32, #tpu.memory_space<vmem>>, vector<1x1024xf32>
    %7 = vector.broadcast %6 : vector<1x1024xf32> to vector<8x1024xf32>
    %8 = arith.addf %5, %7 : vector<8x1024xf32>
    %c0_6 = arith.constant 0 : index
    %c0_7 = arith.constant 0 : index
    %9 = vector.load %arg3[%c0_6, %c0_7] : memref<8x1024xbf16, #tpu.memory_space<vmem>>, vector<8x1024xbf16>
    %10 = arith.extf %9 : vector<8x1024xbf16> to vector<8x1024xf32>
    %11 = arith.addf %8, %10 : vector<8x1024xf32>
    %cst_8 = arith.constant 5.000000e-01 : f32
    %12 = vector.broadcast %cst_8 : f32 to vector<8x1024xf32>
    %13 = arith.mulf %12, %11 : vector<8x1024xf32>
    %cst_9 = arith.constant 5.000000e-01 : f32
    %14 = vector.broadcast %cst_9 : f32 to vector<8x1024xf32>
    %15 = arith.mulf %14, %11 : vector<8x1024xf32>
    %16 = math.tanh %15 : vector<8x1024xf32>
    %cst_10 = arith.constant 1.000000e+00 : f32
    %17 = vector.broadcast %cst_10 : f32 to vector<8x1024xf32>
    %18 = arith.addf %17, %16 : vector<8x1024xf32>
    %19 = arith.mulf %13, %18 : vector<8x1024xf32>
    %c0_11 = arith.constant 0 : index
    %c0_12 = arith.constant 0 : index
    %20 = vector.load %arg5[%c0_11, %c0_12] : memref<8x1024xf32, #tpu.memory_space<vmem>>, vector<8x1024xf32>
    tpu.vector_store %arg5[%c0_11, %c0_12], %19 {strides = array<i32>} : memref<8x1024xf32, #tpu.memory_space<vmem>>, vector<8x1024xf32>,
    return
  }
  func.func @transform_0(%arg0: i32) -> (i32, i32) {
    %c0_i32 = arith.constant 0 : i32
    %c0_i32_0 = arith.constant 0 : i32
    return %arg0, %c0_i32 : i32, i32
  }
  func.func @transform_1(%arg0: i32) -> (i32, i32) {
    %c0_i32 = arith.constant 0 : i32
    %c0_i32_0 = arith.constant 0 : i32
    %c0_i32_1 = arith.constant 0 : i32
    return %c0_i32, %c0_i32_0 : i32, i32
  }
  func.func @transform_2(%arg0: i32) -> (i32, i32) {
    %c0_i32 = arith.constant 0 : i32
    %c0_i32_0 = arith.constant 0 : i32
    return %arg0, %c0_i32 : i32, i32
  }
  func.func @transform_3(%arg0: i32) -> (i32, i32) {
    %c0_i32 = arith.constant 0 : i32
    %c0_i32_0 = arith.constant 0 : i32
    %c0_i32_1 = arith.constant 0 : i32
    return %c0_i32, %c0_i32_0 : i32, i32
  }
  func.func @transform_4(%arg0: i32) -> (i32, i32) {
    %c0_i32 = arith.constant 0 : i32
    %c0_i32_0 = arith.constant 0 : i32
    return %arg0, %c0_i32 : i32, i32
  }
}

</mosaic_0001>

<llo_original>
// kernel: up_layer_forward.3
$region0: #{up_layer_forward.3}
  #allocation0 [shape = 'u32[]', space=smem, size = 0x4, offset = 0x4, fixed_abs, tag = 'smem constant byte address 0x4 - core index']
  #allocation1 [shape = 'u32[144,128]{1,0:T(1,128)}', space=vmem, size = 0x12000, scoped, tag = 'internal scratch']
  %s0 = inlined_call_operand.vmem [shape: bf16[8,128], index: 0, kind: input, shape index: {}]
  %s1 = inlined_call_operand.vmem [shape: bf16[128,1024], index: 1, kind: input, shape index: {}]
  %s2 = inlined_call_operand.vmem [shape: bf16[8,1024], index: 2, kind: input, shape index: {}]
  %s3 = inlined_call_operand.vmem [shape: f32[2,1024], index: 3, kind: input, shape index: {}]
  %s4 = inlined_call_operand.vmem [shape: f32[8,1024], index: 4, kind: output, shape index: {}]
  %s5 = sld [smem:[#allocation0]]
  $region26: #{up_layer_forward.3} parent=0
    _
  %s7 = ssub.s32 1, %s5
  %s8 = scalar_select 0, %s7, %s5
  // Predicated region
  $region2: #{up_layer_forward.3} parent=0 // pred_check
    _
  $region3: #{up_layer_forward.3} parent=0 // pred_check_branch
    %10 = sbr.rel (0) target = $region5
  $region4: #{up_layer_forward.3} parent=0 // pred_region
    _
  $region5: #{up_layer_forward.3} parent=0 // pred_fallthru
    _
  // Predicated region
  $region6: #{up_layer_forward.3} parent=0 // pred_check
    _
  $region7: #{up_layer_forward.3} parent=0 // pred_check_branch
    %12 = sbr.rel (0) target = $region9
  $region8: #{up_layer_forward.3} parent=0 // pred_region
    _
  $region9: #{up_layer_forward.3} parent=0 // pred_fallthru
    _
  // Predicated region
  $region10: #{up_layer_forward.3} parent=0 // pred_check
    _
  $region11: #{up_layer_forward.3} parent=0 // pred_check_branch
    %14 = sbr.rel (0) target = $region13
  $region12: #{up_layer_forward.3} parent=0 // pred_region
    _
  $region13: #{up_layer_forward.3} parent=0 // pred_fallthru
    _
  // Predicated region
  $region14: #{up_layer_forward.3} parent=0 // pred_check
    _
  $region15: #{up_layer_forward.3} parent=0 // pred_check_branch
    %16 = sbr.rel (0) target = $region17
  $region16: #{up_layer_forward.3} parent=0 // pred_region
    _
  $region17: #{up_layer_forward.3} parent=0 // pred_fallthru
    _
  %v18 = vld [vmem:[%s0] sm:$0xf]
  %v19 = vld [vmem:[%s1] sm:$0xff]
  %v20 = vld [vmem:[%s1 + $0x8] sm:$0xff]
  %v21 = vld [vmem:[%s1 + $0x10] sm:$0xff]
  %v22 = vld [vmem:[%s1 + $0x18] sm:$0xff]
  %v23 = vld [vmem:[%s1 + $0x20] sm:$0xff]
  %v24 = vld [vmem:[%s1 + $0x28] sm:$0xff]
  %v25 = vld [vmem:[%s1 + $0x30] sm:$0xff]
  %v26 = vld [vmem:[%s1 + $0x38] sm:$0xff]
  %v27 = vld [vmem:[%s1 + $0x40] sm:$0xff]
  %v28 = vld [vmem:[%s1 + $0x48] sm:$0xff]
  %v29 = vld [vmem:[%s1 + $0x50] sm:$0xff]
  %v30 = vld [vmem:[%s1 + $0x58] sm:$0xff]
  %v31 = vld [vmem:[%s1 + $0x60] sm:$0xff]
  %v32 = vld [vmem:[%s1 + $0x68] sm:$0xff]
  %v33 = vld [vmem:[%s1 + $0x70] sm:$0xff]
  %v34 = vld [vmem:[%s1 + $0x78] sm:$0xff]
  %v35 = vld [vmem:[%s1 + $0x80] sm:$0xff]
  %v36 = vld [vmem:[%s1 + $0x88] sm:$0xff]
  %v37 = vld [vmem:[%s1 + $0x90] sm:$0xff]
  %v38 = vld [vmem:[%s1 + $0x98] sm:$0xff]
  %v39 = vld [vmem:[%s1 + $0xa0] sm:$0xff]
  %v40 = vld [vmem:[%s1 + $0xa8] sm:$0xff]
  %v41 = vld [vmem:[%s1 + $0xb0] sm:$0xff]
  %v42 = vld [vmem:[%s1 + $0xb8] sm:$0xff]
  %v43 = vld [vmem:[%s1 + $0xc0] sm:$0xff]
  %v44 = vld [vmem:[%s1 + $0xc8] sm:$0xff]
  %v45 = vld [vmem:[%s1 + $0xd0] sm:$0xff]
  %v46 = vld [vmem:[%s1 + $0xd8] sm:$0xff]
  %v47 = vld [vmem:[%s1 + $0xe0] sm:$0xff]
  %v48 = vld [vmem:[%s1 + $0xe8] sm:$0xff]
  %v49 = vld [vmem:[%s1 + $0xf0] sm:$0xff]
  %v50 = vld [vmem:[%s1 + $0xf8] sm:$0xff]
  %v51 = vld [vmem:[%s1 + $0x100] sm:$0xff]
  %v52 = vld [vmem:[%s1 + $0x108] sm:$0xff]
  %v53 = vld [vmem:[%s1 + $0x110] sm:$0xff]
  %v54 = vld [vmem:[%s1 + $0x118] sm:$0xff]
  %v55 = vld [vmem:[%s1 + $0x120] sm:$0xff]
  %v56 = vld [vmem:[%s1 + $0x128] sm:$0xff]
  %v57 = vld [vmem:[%s1 + $0x130] sm:$0xff]
  %v58 = vld [vmem:[%s1 + $0x138] sm:$0xff]
  %v59 = vld [vmem:[%s1 + $0x140] sm:$0xff]
  %v60 = vld [vmem:[%s1 + $0x148] sm:$0xff]
  %v61 = vld [vmem:[%s1 + $0x150] sm:$0xff]
  %v62 = vld [vmem:[%s1 + $0x158] sm:$0xff]
  %v63 = vld [vmem:[%s1 + $0x160] sm:$0xff]
  %v64 = vld [vmem:[%s1 + $0x168] sm:$0xff]
  %v65 = vld [vmem:[%s1 + $0x170] sm:$0xff]
  %v66 = vld [vmem:[%s1 + $0x178] sm:$0xff]
  %v67 = vld [vmem:[%s1 + $0x180] sm:$0xff]
  %v68 = vld [vmem:[%s1 + $0x188] sm:$0xff]
  %v69 = vld [vmem:[%s1 + $0x190] sm:$0xff]
  %v70 = vld [vmem:[%s1 + $0x198] sm:$0xff]
  %v71 = vld [vmem:[%s1 + $0x1a0] sm:$0xff]
  %v72 = vld [vmem:[%s1 + $0x1a8] sm:$0xff]
  %v73 = vld [vmem:[%s1 + $0x1b0] sm:$0xff]
  %v74 = vld [vmem:[%s1 + $0x1b8] sm:$0xff]
  %v75 = vld [vmem:[%s1 + $0x1c0] sm:$0xff]
  %v76 = vld [vmem:[%s1 + $0x1c8] sm:$0xff]
  %v77 = vld [vmem:[%s1 + $0x1d0] sm:$0xff]
  %v78 = vld [vmem:[%s1 + $0x1d8] sm:$0xff]
  %v79 = vld [vmem:[%s1 + $0x1e0] sm:$0xff]
  %v80 = vld [vmem:[%s1 + $0x1e8] sm:$0xff]
  %v81 = vld [vmem:[%s1 + $0x1f0] sm:$0xff]
  %v82 = vld [vmem:[%s1 + $0x1f8] sm:$0xff]
  %v147 = vunpack.c.l.b16 %v19
  %v148 = vunpack.c.h.b16 %v19
  %v149 = vunpack.c.l.b16 %v20
  %v150 = vunpack.c.h.b16 %v20
  %v151 = vunpack.c.l.b16 %v21
  %v152 = vunpack.c.h.b16 %v21
  %v153 = vunpack.c.l.b16 %v22
  %v154 = vunpack.c.h.b16 %v22
  %v155 = vunpack.c.l.b16 %v23
  %v156 = vunpack.c.h.b16 %v23
  %v157 = vunpack.c.l.b16 %v24
  %v158 = vunpack.c.h.b16 %v24
  %v159 = vunpack.c.l.b16 %v25
  %v160 = vunpack.c.h.b16 %v25
  %v161 = vunpack.c.l.b16 %v26
  %v162 = vunpack.c.h.b16 %v26
  %v163 = vunpack.c.l.b16 %v27
  %v164 = vunpack.c.h.b16 %v27
  %v165 = vunpack.c.l.b16 %v28
  %v166 = vunpack.c.h.b16 %v28
  %v167 = vunpack.c.l.b16 %v29
  %v168 = vunpack.c.h.b16 %v29
  %v169 = vunpack.c.l.b16 %v30
  %v170 = vunpack.c.h.b16 %v30
  %v171 = vunpack.c.l.b16 %v31
  %v172 = vunpack.c.h.b16 %v31
  %v173 = vunpack.c.l.b16 %v32
  %v174 = vunpack.c.h.b16 %v32
  %v175 = vunpack.c.l.b16 %v33
  %v176 = vunpack.c.h.b16 %v33
  %v177 = vunpack.c.l.b16 %v34
  %v178 = vunpack.c.h.b16 %v34
  %v179 = vunpack.c.l.b16 %v35
  %v180 = vunpack.c.h.b16 %v35
  %v181 = vunpack.c.l.b16 %v36
  %v182 = vunpack.c.h.b16 %v36
  %v183 = vunpack.c.l.b16 %v37
  %v184 = vunpack.c.h.b16 %v37
  %v185 = vunpack.c.l.b16 %v38
  %v186 = vunpack.c.h.b16 %v38
  %v187 = vunpack.c.l.b16 %v39
  %v188 = vunpack.c.h.b16 %v39
  %v189 = vunpack.c.l.b16 %v40
  %v190 = vunpack.c.h.b16 %v40
  %v191 = vunpack.c.l.b16 %v41
  %v192 = vunpack.c.h.b16 %v41
  %v193 = vunpack.c.l.b16 %v42
  %v194 = vunpack.c.h.b16 %v42
  %v195 = vunpack.c.l.b16 %v43
  %v196 = vunpack.c.h.b16 %v43
  %v197 = vunpack.c.l.b16 %v44
  %v198 = vunpack.c.h.b16 %v44
  %v199 = vunpack.c.l.b16 %v45
  %v200 = vunpack.c.h.b16 %v45
  %v201 = vunpack.c.l.b16 %v46
  %v202 = vunpack.c.h.b16 %v46
  %v203 = vunpack.c.l.b16 %v47
  %v204 = vunpack.c.h.b16 %v47
  %v205 = vunpack.c.l.b16 %v48
  %v206 = vunpack.c.h.b16 %v48
  %v207 = vunpack.c.l.b16 %v49
  %v208 = vunpack.c.h.b16 %v49
  %v209 = vunpack.c.l.b16 %v50
  %v210 = vunpack.c.h.b16 %v50
  %v211 = vunpack.c.l.b16 %v51
  %v212 = vunpack.c.h.b16 %v51
  %v213 = vunpack.c.l.b16 %v52
  %v214 = vunpack.c.h.b16 %v52
  %v215 = vunpack.c.l.b16 %v53
  %v216 = vunpack.c.h.b16 %v53
  %v217 = vunpack.c.l.b16 %v54
  %v218 = vunpack.c.h.b16 %v54
  %v219 = vunpack.c.l.b16 %v55
  %v220 = vunpack.c.h.b16 %v55
  %v221 = vunpack.c.l.b16 %v56
  %v222 = vunpack.c.h.b16 %v56
  %v223 = vunpack.c.l.b16 %v57
  %v224 = vunpack.c.h.b16 %v57
  %v225 = vunpack.c.l.b16 %v58
  %v226 = vunpack.c.h.b16 %v58
  %v227 = vunpack.c.l.b16 %v59
  %v228 = vunpack.c.h.b16 %v59
  %v229 = vunpack.c.l.b16 %v60
  %v230 = vunpack.c.h.b16 %v60
  %v231 = vunpack.c.l.b16 %v61
  %v232 = vunpack.c.h.b16 %v61
  %v233 = vunpack.c.l.b16 %v62
  %v234 = vunpack.c.h.b16 %v62
  %v235 = vunpack.c.l.b16 %v63
  %v236 = vunpack.c.h.b16 %v63
  %v237 = vunpack.c.l.b16 %v64
  %v238 = vunpack.c.h.b16 %v64
  %v239 = vunpack.c.l.b16 %v65
  %v240 = vunpack.c.h.b16 %v65
  %v241 = vunpack.c.l.b16 %v66
  %v242 = vunpack.c.h.b16 %v66
  %v243 = vunpack.c.l.b16 %v67
  %v244 = vunpack.c.h.b16 %v67
  %v245 = vunpack.c.l.b16 %v68
  %v246 = vunpack.c.h.b16 %v68
  %v247 = vunpack.c.l.b16 %v69
  %v248 = vunpack.c.h.b16 %v69
  %v249 = vunpack.c.l.b16 %v70
  %v250 = vunpack.c.h.b16 %v70
  %v251 = vunpack.c.l.b16 %v71
  %v252 = vunpack.c.h.b16 %v71
  %v253 = vunpack.c.l.b16 %v72
  %v254 = vunpack.c.h.b16 %v72
  %v255 = vunpack.c.l.b16 %v73
  %v256 = vunpack.c.h.b16 %v73
  %v257 = vunpack.c.l.b16 %v74
  %v258 = vunpack.c.h.b16 %v74
  %v259 = vunpack.c.l.b16 %v75
  %v260 = vunpack.c.h.b16 %v75
  %v261 = vunpack.c.l.b16 %v76
  %v262 = vunpack.c.h.b16 %v76
  %v263 = vunpack.c.l.b16 %v77
  %v264 = vunpack.c.h.b16 %v77
  %v265 = vunpack.c.l.b16 %v78
  %v266 = vunpack.c.h.b16 %v78
  %v267 = vunpack.c.l.b16 %v79
  %v268 = vunpack.c.h.b16 %v79
  %v269 = vunpack.c.l.b16 %v80
  %v270 = vunpack.c.h.b16 %v80
  %v271 = vunpack.c.l.b16 %v81
  %v272 = vunpack.c.h.b16 %v81
  %v273 = vunpack.c.l.b16 %v82
  %v274 = vunpack.c.h.b16 %v82
  %v275 = vpack.c.b16 %v155, %v147
  %v276 = vpack.c.b16 %v156, %v148
  %v277 = vpack.c.b16 %v157, %v149
  %v278 = vpack.c.b16 %v158, %v150
  %v279 = vpack.c.b16 %v159, %v151
  %v280 = vpack.c.b16 %v160, %v152
  %v281 = vpack.c.b16 %v161, %v153
  %v282 = vpack.c.b16 %v162, %v154
  %v283 = vpack.c.b16 %v171, %v163
  %v284 = vpack.c.b16 %v172, %v164
  %v285 = vpack.c.b16 %v173, %v165
  %v286 = vpack.c.b16 %v174, %v166
  %v287 = vpack.c.b16 %v175, %v167
  %v288 = vpack.c.b16 %v176, %v168
  %v289 = vpack.c.b16 %v177, %v169
  %v290 = vpack.c.b16 %v178, %v170
  %v291 = vpack.c.b16 %v187, %v179
  %v292 = vpack.c.b16 %v188, %v180
  %v293 = vpack.c.b16 %v189, %v181
  %v294 = vpack.c.b16 %v190, %v182
  %v295 = vpack.c.b16 %v191, %v183
  %v296 = vpack.c.b16 %v192, %v184
  %v297 = vpack.c.b16 %v193, %v185
  %v298 = vpack.c.b16 %v194, %v186
  %v299 = vpack.c.b16 %v203, %v195
  %v300 = vpack.c.b16 %v204, %v196
  %v301 = vpack.c.b16 %v205, %v197
  %v302 = vpack.c.b16 %v206, %v198
  %v303 = vpack.c.b16 %v207, %v199
  %v304 = vpack.c.b16 %v208, %v200
  %v305 = vpack.c.b16 %v209, %v201
  %v306 = vpack.c.b16 %v210, %v202
  %v307 = vpack.c.b16 %v219, %v211
  %v308 = vpack.c.b16 %v220, %v212
  %v309 = vpack.c.b16 %v221, %v213
  %v310 = vpack.c.b16 %v222, %v214
  %v311 = vpack.c.b16 %v223, %v215
  %v312 = vpack.c.b16 %v224, %v216
  %v313 = vpack.c.b16 %v225, %v217
  %v314 = vpack.c.b16 %v226, %v218
  %v315 = vpack.c.b16 %v235, %v227
  %v316 = vpack.c.b16 %v236, %v228
  %v317 = vpack.c.b16 %v237, %v229
  %v318 = vpack.c.b16 %v238, %v230
  %v319 = vpack.c.b16 %v239, %v231
  %v320 = vpack.c.b16 %v240, %v232
  %v321 = vpack.c.b16 %v241, %v233
  %v322 = vpack.c.b16 %v242, %v234
  %v323 = vpack.c.b16 %v251, %v243
  %v324 = vpack.c.b16 %v252, %v244
  %v325 = vpack.c.b16 %v253, %v245
  %v326 = vpack.c.b16 %v254, %v246
  %v327 = vpack.c.b16 %v255, %v247
  %v328 = vpack.c.b16 %v256, %v248
  %v329 = vpack.c.b16 %v257, %v249
  %v330 = vpack.c.b16 %v258, %v250
  %v331 = vpack.c.b16 %v267, %v259
  %v332 = vpack.c.b16 %v268, %v260
  %v333 = vpack.c.b16 %v269, %v261
  %v334 = vpack.c.b16 %v270, %v262
  %v335 = vpack.c.b16 %v271, %v263
  %v336 = vpack.c.b16 %v272, %v264
  %v337 = vpack.c.b16 %v273, %v265
  %v338 = vpack.c.b16 %v274, %v266
  %403 = vmatprep.subr.bf16.mxu0 %v332
  %404 = vmatpush1.bf16.msra.mxu0 %v331
  %405 = vmatprep.subr.bf16.mxu0 %v324
  %406 = vmatpush1.bf16.msra.mxu0 %v323
  %407 = vmatprep.subr.bf16.mxu0 %v316
  %408 = vmatpush1.bf16.msra.mxu0 %v315
  %409 = vmatprep.subr.bf16.mxu0 %v308
  %410 = vmatpush1.bf16.msra.mxu0 %v307
  %411 = vmatprep.subr.bf16.mxu0 %v300
  %412 = vmatpush1.bf16.msra.mxu0 %v299
  %413 = vmatprep.subr.bf16.mxu0 %v292
  %414 = vmatpush1.bf16.msra.mxu0 %v291
  %415 = vmatprep.subr.bf16.mxu0 %v284
  %416 = vmatpush1.bf16.msra.mxu0 %v283
  %417 = vmatprep.subr.bf16.mxu0 %v276
  %418 = vmatpush1.bf16.msra.mxu0 %v275
  %419 = vmatprep.subr.bf16.mxu0 0
  %420 = vmatpush2.bf16.msra.mxu0 0
  %421 = vmatprep.subr.bf16.mxu0 0
  %422 = vmatpush2.bf16.msra.mxu0 0
  %423 = vmatprep.subr.bf16.mxu0 0
  %424 = vmatpush2.bf16.msra.mxu0 0
  %425 = vmatprep.subr.bf16.mxu0 0
  %426 = vmatpush2.bf16.msra.mxu0 0
  %427 = vmatprep.subr.bf16.mxu0 0
  %428 = vmatpush2.bf16.msra.mxu0 0
  %429 = vmatprep.subr.bf16.mxu0 0
  %430 = vmatpush2.bf16.msra.mxu0 0
  %431 = vmatprep.subr.bf16.mxu0 0
  %432 = vmatpush2.bf16.msra.mxu0 0
  %433 = vmatprep.subr.bf16.mxu0 0
  %434 = vmatpush2.bf16.msra.mxu0 0
  %435 = vmatprep.mubr.bf16.mxu0 0
  %436 = vmatmul.mubr.bf16.gmra.mxu0 %v18
  %v437 = vpop.f32.mrf.mxu0
  %v438 = vadd.f32 0.0, %v437
  %v439 = vpop.f32.mrf.mxu0
  %v440 = vadd.f32 0.0, %v439
  %v441 = vpop.f32.mrf.mxu0
  %v442 = vpop.f32.mrf.mxu0
  %443 = vdwg.mxu0
  %444 = vmatprep.subr.bf16.mxu0 %v334
  %445 = vmatpush1.bf16.msra.mxu0 %v333
  %446 = vmatprep.subr.bf16.mxu0 %v326
  %447 = vmatpush1.bf16.msra.mxu0 %v325
  %448 = vmatprep.subr.bf16.mxu0 %v318
  %449 = vmatpush1.bf16.msra.mxu0 %v317
  %450 = vmatprep.subr.bf16.mxu0 %v310
  %451 = vmatpush1.bf16.msra.mxu0 %v309
  %452 = vmatprep.subr.bf16.mxu0 %v302
  %453 = vmatpush1.bf16.msra.mxu0 %v301
  %454 = vmatprep.subr.bf16.mxu0 %v294
  %455 = vmatpush1.bf16.msra.mxu0 %v293
  %456 = vmatprep.subr.bf16.mxu0 %v286
  %457 = vmatpush1.bf16.msra.mxu0 %v285
  %458 = vmatprep.subr.bf16.mxu0 %v278
  %459 = vmatpush1.bf16.msra.mxu0 %v277
  %460 = vmatprep.subr.bf16.mxu0 0
  %461 = vmatpush2.bf16.msra.mxu0 0
  %462 = vmatprep.subr.bf16.mxu0 0
  %463 = vmatpush2.bf16.msra.mxu0 0
  %464 = vmatprep.subr.bf16.mxu0 0
  %465 = vmatpush2.bf16.msra.mxu0 0
  %466 = vmatprep.subr.bf16.mxu0 0
  %467 = vmatpush2.bf16.msra.mxu0 0
  %468 = vmatprep.subr.bf16.mxu0 0
  %469 = vmatpush2.bf16.msra.mxu0 0
  %470 = vmatprep.subr.bf16.mxu0 0
  %471 = vmatpush2.bf16.msra.mxu0 0
  %472 = vmatprep.subr.bf16.mxu0 0
  %473 = vmatpush2.bf16.msra.mxu0 0
  %474 = vmatprep.subr.bf16.mxu0 0
  %475 = vmatpush2.bf16.msra.mxu0 0
  %476 = vmatprep.mubr.bf16.mxu0 0
  %477 = vmatmul.mubr.bf16.gmra.mxu0 %v18
  %v478 = vpop.f32.mrf.mxu0
  %v479 = vadd.f32 0.0, %v478
  %v480 = vpop.f32.mrf.mxu0
  %v481 = vadd.f32 0.0, %v480
  %v482 = vpop.f32.mrf.mxu0
  %v483 = vpop.f32.mrf.mxu0
  %484 = vdwg.mxu0
  %485 = vmatprep.subr.bf16.mxu0 %v336
  %486 = vmatpush1.bf16.msra.mxu0 %v335
  %487 = vmatprep.subr.bf16.mxu0 %v328
  %488 = vmatpush1.bf16.msra.mxu0 %v327
  %489 = vmatprep.subr.bf16.mxu0 %v320
  %490 = vmatpush1.bf16.msra.mxu0 %v319
  %491 = vmatprep.subr.bf16.mxu0 %v312
  %492 = vmatpush1.bf16.msra.mxu0 %v311
  %493 = vmatprep.subr.bf16.mxu0 %v304
  %494 = vmatpush1.bf16.msra.mxu0 %v303
  %495 = vmatprep.subr.bf16.mxu0 %v296
  %496 = vmatpush1.bf16.msra.mxu0 %v295
  %497 = vmatprep.subr.bf16.mxu0 %v288
  %498 = vmatpush1.bf16.msra.mxu0 %v287
  %499 = vmatprep.subr.bf16.mxu0 %v280
  %500 = vmatpush1.bf16.msra.mxu0 %v279
  %501 = vmatprep.subr.bf16.mxu0 0
  %502 = vmatpush2.bf16.msra.mxu0 0
  %503 = vmatprep.subr.bf16.mxu0 0
  %504 = vmatpush2.bf16.msra.mxu0 0
  %505 = vmatprep.subr.bf16.mxu0 0
  %506 = vmatpush2.bf16.msra.mxu0 0
  %507 = vmatprep.subr.bf16.mxu0 0
  %508 = vmatpush2.bf16.msra.mxu0 0
  %509 = vmatprep.subr.bf16.mxu0 0
  %510 = vmatpush2.bf16.msra.mxu0 0
  %511 = vmatprep.subr.bf16.mxu0 0
  %512 = vmatpush2.bf16.msra.mxu0 0
  %513 = vmatprep.subr.bf16.mxu0 0
  %514 = vmatpush2.bf16.msra.mxu0 0
  %515 = vmatprep.subr.bf16.mxu0 0
  %516 = vmatpush2.bf16.msra.mxu0 0
  %517 = vmatprep.mubr.bf16.mxu0 0
  %518 = vmatmul.mubr.bf16.gmra.mxu0 %v18
  %v519 = vpop.f32.mrf.mxu0
  %v520 = vadd.f32 0.0, %v519
  %v521 = vpop.f32.mrf.mxu0
  %v522 = vadd.f32 0.0, %v521
  %v523 = vpop.f32.mrf.mxu0
  %v524 = vpop.f32.mrf.mxu0
  %525 = vdwg.mxu0
  %526 = vmatprep.subr.bf16.mxu0 %v338
  %527 = vmatpush1.bf16.msra.mxu0 %v337
  %528 = vmatprep.subr.bf16.mxu0 %v330
  %529 = vmatpush1.bf16.msra.mxu0 %v329
  %530 = vmatprep.subr.bf16.mxu0 %v322
  %531 = vmatpush1.bf16.msra.mxu0 %v321
  %532 = vmatprep.subr.bf16.mxu0 %v314
  %533 = vmatpush1.bf16.msra.mxu0 %v313
  %534 = vmatprep.subr.bf16.mxu0 %v306
  %535 = vmatpush1.bf16.msra.mxu0 %v305
  %536 = vmatprep.subr.bf16.mxu0 %v298
  %537 = vmatpush1.bf16.msra.mxu0 %v297
  %538 = vmatprep.subr.bf16.mxu0 %v290
  %539 = vmatpush1.bf16.msra.mxu0 %v289
  %540 = vmatprep.subr.bf16.mxu0 %v282
  %541 = vmatpush1.bf16.msra.mxu0 %v281
  %542 = vmatprep.subr.bf16.mxu0 0
  %543 = vmatpush2.bf16.msra.mxu0 0
  %544 = vmatprep.subr.bf16.mxu0 0
  %545 = vmatpush2.bf16.msra.mxu0 0
  %546 = vmatprep.subr.bf16.mxu0 0
  %547 = vmatpush2.bf16.msra.mxu0 0
  %548 = vmatprep.subr.bf16.mxu0 0
  %549 = vmatpush2.bf16.msra.mxu0 0
  %550 = vmatprep.subr.bf16.mxu0 0
  %551 = vmatpush2.bf16.msra.mxu0 0
  %552 = vmatprep.subr.bf16.mxu0 0
  %553 = vmatpush2.bf16.msra.mxu0 0
  %554 = vmatprep.subr.bf16.mxu0 0
  %555 = vmatpush2.bf16.msra.mxu0 0
  %556 = vmatprep.subr.bf16.mxu0 0
  %557 = vmatpush2.bf16.msra.mxu0 0
  %558 = vmatprep.mubr.bf16.mxu0 0
  %559 = vmatmul.mubr.bf16.gmra.mxu0 %v18
  %v560 = vpop.f32.mrf.mxu0
  %v561 = vadd.f32 0.0, %v560
  %v562 = vpop.f32.mrf.mxu0
  %v563 = vadd.f32 0.0, %v562
  %v564 = vpop.f32.mrf.mxu0
  %v565 = vpop.f32.mrf.mxu0
  %566 = vdwg.mxu0
  %v567 = vld [vmem:[%s3] ss:$2 sm:$0xff]
  %v569 = vlaneseq
  %v570 = vshrl.u32 %v569, 7
  %v571 = vsub.s32 0, %v570
  %v572 = vrot.slane %v567, %v571
  %v573 = vlaneseq
  %v574 = vshrl.u32 %v573, 7
  %v575 = vsub.s32 1, %v574
  %v576 = vrot.slane %v567, %v575
  %v577 = vlaneseq
  %v578 = vshrl.u32 %v577, 7
  %v579 = vsub.s32 2, %v578
  %v580 = vrot.slane %v567, %v579
  %v581 = vlaneseq
  %v582 = vshrl.u32 %v581, 7
  %v583 = vsub.s32 3, %v582
  %v584 = vrot.slane %v567, %v583
  %v585 = vlaneseq
  %v586 = vshrl.u32 %v585, 7
  %v587 = vsub.s32 4, %v586
  %v588 = vrot.slane %v567, %v587
  %v589 = vlaneseq
  %v590 = vshrl.u32 %v589, 7
  %v591 = vsub.s32 5, %v590
  %v592 = vrot.slane %v567, %v591
  %v593 = vlaneseq
  %v594 = vshrl.u32 %v593, 7
  %v595 = vsub.s32 6, %v594
  %v596 = vrot.slane %v567, %v595
  %v597 = vlaneseq
  %v598 = vshrl.u32 %v597, 7
  %v599 = vsub.s32 7, %v598
  %v600 = vrot.slane %v567, %v599
  %v609 = vmul.f32 %v438, %v572
  %v610 = vmul.f32 %v440, %v576
  %v611 = vmul.f32 %v479, %v580
  %v612 = vmul.f32 %v481, %v584
  %v613 = vmul.f32 %v520, %v588
  %v614 = vmul.f32 %v522, %v592
  %v615 = vmul.f32 %v561, %v596
  %v616 = vmul.f32 %v563, %v600
  %s617 = scalar_lea.vmem %s3, 1
  %v618 = vld [vmem:[%s617] ss:$2 sm:$0xff]
  %v620 = vlaneseq
  %v621 = vshrl.u32 %v620, 7
  %v622 = vsub.s32 0, %v621
  %v623 = vrot.slane %v618, %v622
  %v624 = vlaneseq
  %v625 = vshrl.u32 %v624, 7
  %v626 = vsub.s32 1, %v625
  %v627 = vrot.slane %v618, %v626
  %v628 = vlaneseq
  %v629 = vshrl.u32 %v628, 7
  %v630 = vsub.s32 2, %v629
  %v631 = vrot.slane %v618, %v630
  %v632 = vlaneseq
  %v633 = vshrl.u32 %v632, 7
  %v634 = vsub.s32 3, %v633
  %v635 = vrot.slane %v618, %v634
  %v636 = vlaneseq
  %v637 = vshrl.u32 %v636, 7
  %v638 = vsub.s32 4, %v637
  %v639 = vrot.slane %v618, %v638
  %v640 = vlaneseq
  %v641 = vshrl.u32 %v640, 7
  %v642 = vsub.s32 5, %v641
  %v643 = vrot.slane %v618, %v642
  %v644 = vlaneseq
  %v645 = vshrl.u32 %v644, 7
  %v646 = vsub.s32 6, %v645
  %v647 = vrot.slane %v618, %v646
  %v648 = vlaneseq
  %v649 = vshrl.u32 %v648, 7
  %v650 = vsub.s32 7, %v649
  %v651 = vrot.slane %v618, %v650
  %v660 = vadd.f32 %v609, %v623
  %v661 = vadd.f32 %v610, %v627
  %v662 = vadd.f32 %v611, %v631
  %v663 = vadd.f32 %v612, %v635
  %v664 = vadd.f32 %v613, %v639
  %v665 = vadd.f32 %v614, %v643
  %v666 = vadd.f32 %v615, %v647
  %v667 = vadd.f32 %v616, %v651
  %v668 = vld [vmem:[%s2] sm:$0xff]
  %v669 = vld [vmem:[%s2 + $0x8] sm:$0xff]
  %v670 = vld [vmem:[%s2 + $0x10] sm:$0xff]
  %v671 = vld [vmem:[%s2 + $0x18] sm:$0xff]
  %v672 = vunpack.c.l.bf16 %v668
  %v673 = vunpack.c.h.bf16 %v668
  %v674 = vunpack.c.l.bf16 %v669
  %v675 = vunpack.c.h.bf16 %v669
  %v676 = vunpack.c.l.bf16 %v670
  %v677 = vunpack.c.h.bf16 %v670
  %v678 = vunpack.c.l.bf16 %v671
  %v679 = vunpack.c.h.bf16 %v671
  %v680 = vadd.f32 %v660, %v672
  %v681 = vadd.f32 %v661, %v673
  %v682 = vadd.f32 %v662, %v674
  %v683 = vadd.f32 %v663, %v675
  %v684 = vadd.f32 %v664, %v676
  %v685 = vadd.f32 %v665, %v677
  %v686 = vadd.f32 %v666, %v678
  %v687 = vadd.f32 %v667, %v679
  %v688 = vmul.f32 %v680, 0.5
  %v689 = vmul.f32 %v681, 0.5
  %v690 = vmul.f32 %v682, 0.5
  %v691 = vmul.f32 %v683, 0.5
  %v692 = vmul.f32 %v684, 0.5
  %v693 = vmul.f32 %v685, 0.5
  %v694 = vmul.f32 %v686, 0.5
  %v695 = vmul.f32 %v687, 0.5
  %v696 = vtanh.pop %v688
  %v697 = vtanh.pop %v689
  %v698 = vtanh.pop %v690
  %v699 = vtanh.pop %v691
  %v700 = vtanh.pop %v692
  %v701 = vtanh.pop %v693
  %v702 = vtanh.pop %v694
  %v703 = vtanh.pop %v695
  %v704 = vadd.f32 %v696, 1.0
  %v705 = vadd.f32 %v697, 1.0
  %v706 = vadd.f32 %v698, 1.0
  %v707 = vadd.f32 %v699, 1.0
  %v708 = vadd.f32 %v700, 1.0
  %v709 = vadd.f32 %v701, 1.0
  %v710 = vadd.f32 %v702, 1.0
  %v711 = vadd.f32 %v703, 1.0
  %v712 = vmul.f32 %v688, %v704
  %v713 = vmul.f32 %v689, %v705
  %v714 = vmul.f32 %v690, %v706
  %v715 = vmul.f32 %v691, %v707
  %v716 = vmul.f32 %v692, %v708
  %v717 = vmul.f32 %v693, %v709
  %v718 = vmul.f32 %v694, %v710
  %v719 = vmul.f32 %v695, %v711
  %720 = vst [vmem:[%s4] sm:$0xff] %v712
  %721 = vst [vmem:[%s4 + $0x8] sm:$0xff] %v713
  %722 = vst [vmem:[%s4 + $0x10] sm:$0xff] %v714
  %723 = vst [vmem:[%s4 + $0x18] sm:$0xff] %v715
  %724 = vst [vmem:[%s4 + $0x20] sm:$0xff] %v716
  %725 = vst [vmem:[%s4 + $0x28] sm:$0xff] %v717
  %726 = vst [vmem:[%s4 + $0x30] sm:$0xff] %v718
  %727 = vst [vmem:[%s4 + $0x38] sm:$0xff] %v719
  // Predicated region
  $region18: #{up_layer_forward.3} parent=0 // pred_check
    _
  $region19: #{up_layer_forward.3} parent=0 // pred_check_branch
    %729 = sbr.rel (0) target = $region21
  $region20: #{up_layer_forward.3} parent=0 // pred_region
    _
  $region21: #{up_layer_forward.3} parent=0 // pred_fallthru
    _
  // Predicated region
  $region22: #{up_layer_forward.3} parent=0 // pred_check
    _
  $region23: #{up_layer_forward.3} parent=0 // pred_check_branch
    %731 = sbr.rel (0) target = $region25
  $region24: #{up_layer_forward.3} parent=0 // pred_region
    _
  $region25: #{up_layer_forward.3} parent=0 // pred_fallthru
    _

// kernel: up_layer_forward.2
$region0: #{up_layer_forward.2}
  #allocation0 [shape = 'u32[]', space=smem, size = 0x4, offset = 0x4, fixed_abs, tag = 'smem constant byte address 0x4 - core index']
  #allocation1 [shape = 'u32[144,128]{1,0:T(1,128)}', space=vmem, size = 0x12000, scoped, tag = 'internal scratch']
  %s0 = inlined_call_operand.vmem [shape: bf16[8,128], index: 0, kind: input, shape index: {}]
  %s1 = inlined_call_operand.vmem [shape: bf16[128,1024], index: 1, kind: input, shape index: {}]
  %s2 = inlined_call_operand.vmem [shape: f32[1024,128], index: 2, kind: input, shape index: {}]
  %s3 = inlined_call_operand.vmem [shape: f32[1,2,128], index: 3, kind: output, shape index: {}]
  %s4 = sld [smem:[#allocation0]]
  $region22: #{up_layer_forward.2} parent=0
    _
  %s6 = ssub.s32 1, %s4
  %s7 = scalar_select 0, %s6, %s4
  // Predicated region
  $region2: #{up_layer_forward.2} parent=0 // pred_check
    _
  $region3: #{up_layer_forward.2} parent=0 // pred_check_branch
    %9 = sbr.rel (0) target = $region5
  $region4: #{up_layer_forward.2} parent=0 // pred_region
    _
  $region5: #{up_layer_forward.2} parent=0 // pred_fallthru
    _
  // Predicated region
  $region6: #{up_layer_forward.2} parent=0 // pred_check
    _
  $region7: #{up_layer_forward.2} parent=0 // pred_check_branch
    %11 = sbr.rel (0) target = $region9
  $region8: #{up_layer_forward.2} parent=0 // pred_region
    _
  $region9: #{up_layer_forward.2} parent=0 // pred_fallthru
    _
  // Predicated region
  $region10: #{up_layer_forward.2} parent=0 // pred_check
    _
  $region11: #{up_layer_forward.2} parent=0 // pred_check_branch
    %13 = sbr.rel (0) target = $region13
  $region12: #{up_layer_forward.2} parent=0 // pred_region
    _
  $region13: #{up_layer_forward.2} parent=0 // pred_fallthru
    _
  %v15 = vld [vmem:[%s0] sm:$0xf]
  %v16 = vld [vmem:[%s1] sm:$0xff]
  %v17 = vld [vmem:[%s1 + $0x8] sm:$0xff]
  %v18 = vld [vmem:[%s1 + $0x10] sm:$0xff]
  %v19 = vld [vmem:[%s1 + $0x18] sm:$0xff]
  %v20 = vld [vmem:[%s1 + $0x20] sm:$0xff]
  %v21 = vld [vmem:[%s1 + $0x28] sm:$0xff]
  %v22 = vld [vmem:[%s1 + $0x30] sm:$0xff]
  %v23 = vld [vmem:[%s1 + $0x38] sm:$0xff]
  %v24 = vld [vmem:[%s1 + $0x40] sm:$0xff]
  %v25 = vld [vmem:[%s1 + $0x48] sm:$0xff]
  %v26 = vld [vmem:[%s1 + $0x50] sm:$0xff]
  %v27 = vld [vmem:[%s1 + $0x58] sm:$0xff]
  %v28 = vld [vmem:[%s1 + $0x60] sm:$0xff]
  %v29 = vld [vmem:[%s1 + $0x68] sm:$0xff]
  %v30 = vld [vmem:[%s1 + $0x70] sm:$0xff]
  %v31 = vld [vmem:[%s1 + $0x78] sm:$0xff]
  %v32 = vld [vmem:[%s1 + $0x80] sm:$0xff]
  %v33 = vld [vmem:[%s1 + $0x88] sm:$0xff]
  %v34 = vld [vmem:[%s1 + $0x90] sm:$0xff]
  %v35 = vld [vmem:[%s1 + $0x98] sm:$0xff]
  %v36 = vld [vmem:[%s1 + $0xa0] sm:$0xff]
  %v37 = vld [vmem:[%s1 + $0xa8] sm:$0xff]
  %v38 = vld [vmem:[%s1 + $0xb0] sm:$0xff]
  %v39 = vld [vmem:[%s1 + $0xb8] sm:$0xff]
  %v40 = vld [vmem:[%s1 + $0xc0] sm:$0xff]
  %v41 = vld [vmem:[%s1 + $0xc8] sm:$0xff]
  %v42 = vld [vmem:[%s1 + $0xd0] sm:$0xff]
  %v43 = vld [vmem:[%s1 + $0xd8] sm:$0xff]
  %v44 = vld [vmem:[%s1 + $0xe0] sm:$0xff]
  %v45 = vld [vmem:[%s1 + $0xe8] sm:$0xff]
  %v46 = vld [vmem:[%s1 + $0xf0] sm:$0xff]
  %v47 = vld [vmem:[%s1 + $0xf8] sm:$0xff]
  %v48 = vld [vmem:[%s1 + $0x100] sm:$0xff]
  %v49 = vld [vmem:[%s1 + $0x108] sm:$0xff]
  %v50 = vld [vmem:[%s1 + $0x110] sm:$0xff]
  %v51 = vld [vmem:[%s1 + $0x118] sm:$0xff]
  %v52 = vld [vmem:[%s1 + $0x120] sm:$0xff]
  %v53 = vld [vmem:[%s1 + $0x128] sm:$0xff]
  %v54 = vld [vmem:[%s1 + $0x130] sm:$0xff]
  %v55 = vld [vmem:[%s1 + $0x138] sm:$0xff]
  %v56 = vld [vmem:[%s1 + $0x140] sm:$0xff]
  %v57 = vld [vmem:[%s1 + $0x148] sm:$0xff]
  %v58 = vld [vmem:[%s1 + $0x150] sm:$0xff]
  %v59 = vld [vmem:[%s1 + $0x158] sm:$0xff]
  %v60 = vld [vmem:[%s1 + $0x160] sm:$0xff]
  %v61 = vld [vmem:[%s1 + $0x168] sm:$0xff]
  %v62 = vld [vmem:[%s1 + $0x170] sm:$0xff]
  %v63 = vld [vmem:[%s1 + $0x178] sm:$0xff]
  %v64 = vld [vmem:[%s1 + $0x180] sm:$0xff]
  %v65 = vld [vmem:[%s1 + $0x188] sm:$0xff]
  %v66 = vld [vmem:[%s1 + $0x190] sm:$0xff]
  %v67 = vld [vmem:[%s1 + $0x198] sm:$0xff]
  %v68 = vld [vmem:[%s1 + $0x1a0] sm:$0xff]
  %v69 = vld [vmem:[%s1 + $0x1a8] sm:$0xff]
  %v70 = vld [vmem:[%s1 + $0x1b0] sm:$0xff]
  %v71 = vld [vmem:[%s1 + $0x1b8] sm:$0xff]
  %v72 = vld [vmem:[%s1 + $0x1c0] sm:$0xff]
  %v73 = vld [vmem:[%s1 + $0x1c8] sm:$0xff]
  %v74 = vld [vmem:[%s1 + $0x1d0] sm:$0xff]
  %v75 = vld [vmem:[%s1 + $0x1d8] sm:$0xff]
  %v76 = vld [vmem:[%s1 + $0x1e0] sm:$0xff]
  %v77 = vld [vmem:[%s1 + $0x1e8] sm:$0xff]
  %v78 = vld [vmem:[%s1 + $0x1f0] sm:$0xff]
  %v79 = vld [vmem:[%s1 + $0x1f8] sm:$0xff]
  %v144 = vunpack.c.l.b16 %v16
  %v145 = vunpack.c.h.b16 %v16
  %v146 = vunpack.c.l.b16 %v17
  %v147 = vunpack.c.h.b16 %v17
  %v148 = vunpack.c.l.b16 %v18
  %v149 = vunpack.c.h.b16 %v18
  %v150 = vunpack.c.l.b16 %v19
  %v151 = vunpack.c.h.b16 %v19
  %v152 = vunpack.c.l.b16 %v20
  %v153 = vunpack.c.h.b16 %v20
  %v154 = vunpack.c.l.b16 %v21
  %v155 = vunpack.c.h.b16 %v21
  %v156 = vunpack.c.l.b16 %v22
  %v157 = vunpack.c.h.b16 %v22
  %v158 = vunpack.c.l.b16 %v23
  %v159 = vunpack.c.h.b16 %v23
  %v160 = vunpack.c.l.b16 %v24
  %v161 = vunpack.c.h.b16 %v24
  %v162 = vunpack.c.l.b16 %v25
  %v163 = vunpack.c.h.b16 %v25
  %v164 = vunpack.c.l.b16 %v26
  %v165 = vunpack.c.h.b16 %v26
  %v166 = vunpack.c.l.b16 %v27
  %v167 = vunpack.c.h.b16 %v27
  %v168 = vunpack.c.l.b16 %v28
  %v169 = vunpack.c.h.b16 %v28
  %v170 = vunpack.c.l.b16 %v29
  %v171 = vunpack.c.h.b16 %v29
  %v172 = vunpack.c.l.b16 %v30
  %v173 = vunpack.c.h.b16 %v30
  %v174 = vunpack.c.l.b16 %v31
  %v175 = vunpack.c.h.b16 %v31
  %v176 = vunpack.c.l.b16 %v32
  %v177 = vunpack.c.h.b16 %v32
  %v178 = vunpack.c.l.b16 %v33
  %v179 = vunpack.c.h.b16 %v33
  %v180 = vunpack.c.l.b16 %v34
  %v181 = vunpack.c.h.b16 %v34
  %v182 = vunpack.c.l.b16 %v35
  %v183 = vunpack.c.h.b16 %v35
  %v184 = vunpack.c.l.b16 %v36
  %v185 = vunpack.c.h.b16 %v36
  %v186 = vunpack.c.l.b16 %v37
  %v187 = vunpack.c.h.b16 %v37
  %v188 = vunpack.c.l.b16 %v38
  %v189 = vunpack.c.h.b16 %v38
  %v190 = vunpack.c.l.b16 %v39
  %v191 = vunpack.c.h.b16 %v39
  %v192 = vunpack.c.l.b16 %v40
  %v193 = vunpack.c.h.b16 %v40
  %v194 = vunpack.c.l.b16 %v41
  %v195 = vunpack.c.h.b16 %v41
  %v196 = vunpack.c.l.b16 %v42
  %v197 = vunpack.c.h.b16 %v42
  %v198 = vunpack.c.l.b16 %v43
  %v199 = vunpack.c.h.b16 %v43
  %v200 = vunpack.c.l.b16 %v44
  %v201 = vunpack.c.h.b16 %v44
  %v202 = vunpack.c.l.b16 %v45
  %v203 = vunpack.c.h.b16 %v45
  %v204 = vunpack.c.l.b16 %v46
  %v205 = vunpack.c.h.b16 %v46
  %v206 = vunpack.c.l.b16 %v47
  %v207 = vunpack.c.h.b16 %v47
  %v208 = vunpack.c.l.b16 %v48
  %v209 = vunpack.c.h.b16 %v48
  %v210 = vunpack.c.l.b16 %v49
  %v211 = vunpack.c.h.b16 %v49
  %v212 = vunpack.c.l.b16 %v50
  %v213 = vunpack.c.h.b16 %v50
  %v214 = vunpack.c.l.b16 %v51
  %v215 = vunpack.c.h.b16 %v51
  %v216 = vunpack.c.l.b16 %v52
  %v217 = vunpack.c.h.b16 %v52
  %v218 = vunpack.c.l.b16 %v53
  %v219 = vunpack.c.h.b16 %v53
  %v220 = vunpack.c.l.b16 %v54
  %v221 = vunpack.c.h.b16 %v54
  %v222 = vunpack.c.l.b16 %v55
  %v223 = vunpack.c.h.b16 %v55
  %v224 = vunpack.c.l.b16 %v56
  %v225 = vunpack.c.h.b16 %v56
  %v226 = vunpack.c.l.b16 %v57
  %v227 = vunpack.c.h.b16 %v57
  %v228 = vunpack.c.l.b16 %v58
  %v229 = vunpack.c.h.b16 %v58
  %v230 = vunpack.c.l.b16 %v59
  %v231 = vunpack.c.h.b16 %v59
  %v232 = vunpack.c.l.b16 %v60
  %v233 = vunpack.c.h.b16 %v60
  %v234 = vunpack.c.l.b16 %v61
  %v235 = vunpack.c.h.b16 %v61
  %v236 = vunpack.c.l.b16 %v62
  %v237 = vunpack.c.h.b16 %v62
  %v238 = vunpack.c.l.b16 %v63
  %v239 = vunpack.c.h.b16 %v63
  %v240 = vunpack.c.l.b16 %v64
  %v241 = vunpack.c.h.b16 %v64
  %v242 = vunpack.c.l.b16 %v65
  %v243 = vunpack.c.h.b16 %v65
  %v244 = vunpack.c.l.b16 %v66
  %v245 = vunpack.c.h.b16 %v66
  %v246 = vunpack.c.l.b16 %v67
  %v247 = vunpack.c.h.b16 %v67
  %v248 = vunpack.c.l.b16 %v68
  %v249 = vunpack.c.h.b16 %v68
  %v250 = vunpack.c.l.b16 %v69
  %v251 = vunpack.c.h.b16 %v69
  %v252 = vunpack.c.l.b16 %v70
  %v253 = vunpack.c.h.b16 %v70
  %v254 = vunpack.c.l.b16 %v71
  %v255 = vunpack.c.h.b16 %v71
  %v256 = vunpack.c.l.b16 %v72
  %v257 = vunpack.c.h.b16 %v72
  %v258 = vunpack.c.l.b16 %v73
  %v259 = vunpack.c.h.b16 %v73
  %v260 = vunpack.c.l.b16 %v74
  %v261 = vunpack.c.h.b16 %v74
  %v262 = vunpack.c.l.b16 %v75
  %v263 = vunpack.c.h.b16 %v75
  %v264 = vunpack.c.l.b16 %v76
  %v265 = vunpack.c.h.b16 %v76
  %v266 = vunpack.c.l.b16 %v77
  %v267 = vunpack.c.h.b16 %v77
  %v268 = vunpack.c.l.b16 %v78
  %v269 = vunpack.c.h.b16 %v78
  %v270 = vunpack.c.l.b16 %v79
  %v271 = vunpack.c.h.b16 %v79
  %v272 = vpack.c.b16 %v152, %v144
  %v273 = vpack.c.b16 %v153, %v145
  %v274 = vpack.c.b16 %v154, %v146
  %v275 = vpack.c.b16 %v155, %v147
  %v276 = vpack.c.b16 %v156, %v148
  %v277 = vpack.c.b16 %v157, %v149
  %v278 = vpack.c.b16 %v158, %v150
  %v279 = vpack.c.b16 %v159, %v151
  %v280 = vpack.c.b16 %v168, %v160
  %v281 = vpack.c.b16 %v169, %v161
  %v282 = vpack.c.b16 %v170, %v162
  %v283 = vpack.c.b16 %v171, %v163
  %v284 = vpack.c.b16 %v172, %v164
  %v285 = vpack.c.b16 %v173, %v165
  %v286 = vpack.c.b16 %v174, %v166
  %v287 = vpack.c.b16 %v175, %v167
  %v288 = vpack.c.b16 %v184, %v176
  %v289 = vpack.c.b16 %v185, %v177
  %v290 = vpack.c.b16 %v186, %v178
  %v291 = vpack.c.b16 %v187, %v179
  %v292 = vpack.c.b16 %v188, %v180
  %v293 = vpack.c.b16 %v189, %v181
  %v294 = vpack.c.b16 %v190, %v182
  %v295 = vpack.c.b16 %v191, %v183
  %v296 = vpack.c.b16 %v200, %v192
  %v297 = vpack.c.b16 %v201, %v193
  %v298 = vpack.c.b16 %v202, %v194
  %v299 = vpack.c.b16 %v203, %v195
  %v300 = vpack.c.b16 %v204, %v196
  %v301 = vpack.c.b16 %v205, %v197
  %v302 = vpack.c.b16 %v206, %v198
  %v303 = vpack.c.b16 %v207, %v199
  %v304 = vpack.c.b16 %v216, %v208
  %v305 = vpack.c.b16 %v217, %v209
  %v306 = vpack.c.b16 %v218, %v210
  %v307 = vpack.c.b16 %v219, %v211
  %v308 = vpack.c.b16 %v220, %v212
  %v309 = vpack.c.b16 %v221, %v213
  %v310 = vpack.c.b16 %v222, %v214
  %v311 = vpack.c.b16 %v223, %v215
  %v312 = vpack.c.b16 %v232, %v224
  %v313 = vpack.c.b16 %v233, %v225
  %v314 = vpack.c.b16 %v234, %v226
  %v315 = vpack.c.b16 %v235, %v227
  %v316 = vpack.c.b16 %v236, %v228
  %v317 = vpack.c.b16 %v237, %v229
  %v318 = vpack.c.b16 %v238, %v230
  %v319 = vpack.c.b16 %v239, %v231
  %v320 = vpack.c.b16 %v248, %v240
  %v321 = vpack.c.b16 %v249, %v241
  %v322 = vpack.c.b16 %v250, %v242
  %v323 = vpack.c.b16 %v251, %v243
  %v324 = vpack.c.b16 %v252, %v244
  %v325 = vpack.c.b16 %v253, %v245
  %v326 = vpack.c.b16 %v254, %v246
  %v327 = vpack.c.b16 %v255, %v247
  %v328 = vpack.c.b16 %v264, %v256
  %v329 = vpack.c.b16 %v265, %v257
  %v330 = vpack.c.b16 %v266, %v258
  %v331 = vpack.c.b16 %v267, %v259
  %v332 = vpack.c.b16 %v268, %v260
  %v333 = vpack.c.b16 %v269, %v261
  %v334 = vpack.c.b16 %v270, %v262
  %v335 = vpack.c.b16 %v271, %v263
  %400 = vmatprep.subr.bf16.mxu0 %v329
  %401 = vmatpush1.bf16.msra.mxu0 %v328
  %402 = vmatprep.subr.bf16.mxu0 %v321
  %403 = vmatpush1.bf16.msra.mxu0 %v320
  %404 = vmatprep.subr.bf16.mxu0 %v313
  %405 = vmatpush1.bf16.msra.mxu0 %v312
  %406 = vmatprep.subr.bf16.mxu0 %v305
  %407 = vmatpush1.bf16.msra.mxu0 %v304
  %408 = vmatprep.subr.bf16.mxu0 %v297
  %409 = vmatpush1.bf16.msra.mxu0 %v296
  %410 = vmatprep.subr.bf16.mxu0 %v289
  %411 = vmatpush1.bf16.msra.mxu0 %v288
  %412 = vmatprep.subr.bf16.mxu0 %v281
  %413 = vmatpush1.bf16.msra.mxu0 %v280
  %414 = vmatprep.subr.bf16.mxu0 %v273
  %415 = vmatpush1.bf16.msra.mxu0 %v272
  %416 = vmatprep.subr.bf16.mxu0 0
  %417 = vmatpush2.bf16.msra.mxu0 0
  %418 = vmatprep.subr.bf16.mxu0 0
  %419 = vmatpush2.bf16.msra.mxu0 0
  %420 = vmatprep.subr.bf16.mxu0 0
  %421 = vmatpush2.bf16.msra.mxu0 0
  %422 = vmatprep.subr.bf16.mxu0 0
  %423 = vmatpush2.bf16.msra.mxu0 0
  %424 = vmatprep.subr.bf16.mxu0 0
  %425 = vmatpush2.bf16.msra.mxu0 0
  %426 = vmatprep.subr.bf16.mxu0 0
  %427 = vmatpush2.bf16.msra.mxu0 0
  %428 = vmatprep.subr.bf16.mxu0 0
  %429 = vmatpush2.bf16.msra.mxu0 0
  %430 = vmatprep.subr.bf16.mxu0 0
  %431 = vmatpush2.bf16.msra.mxu0 0
  %432 = vmatprep.mubr.bf16.mxu0 0
  %433 = vmatmul.mubr.bf16.gmra.mxu0 %v15
  %v434 = vpop.f32.mrf.mxu0
  %v435 = vadd.f32 0.0, %v434
  %v436 = vpop.f32.mrf.mxu0
  %v437 = vadd.f32 0.0, %v436
  %v438 = vpop.f32.mrf.mxu0
  %v439 = vpop.f32.mrf.mxu0
  %440 = vdwg.mxu0
  %441 = vmatprep.subr.bf16.mxu0 %v331
  %442 = vmatpush1.bf16.msra.mxu0 %v330
  %443 = vmatprep.subr.bf16.mxu0 %v323
  %444 = vmatpush1.bf16.msra.mxu0 %v322
  %445 = vmatprep.subr.bf16.mxu0 %v315
  %446 = vmatpush1.bf16.msra.mxu0 %v314
  %447 = vmatprep.subr.bf16.mxu0 %v307
  %448 = vmatpush1.bf16.msra.mxu0 %v306
  %449 = vmatprep.subr.bf16.mxu0 %v299
  %450 = vmatpush1.bf16.msra.mxu0 %v298
  %451 = vmatprep.subr.bf16.mxu0 %v291
  %452 = vmatpush1.bf16.msra.mxu0 %v290
  %453 = vmatprep.subr.bf16.mxu0 %v283
  %454 = vmatpush1.bf16.msra.mxu0 %v282
  %455 = vmatprep.subr.bf16.mxu0 %v275
  %456 = vmatpush1.bf16.msra.mxu0 %v274
  %457 = vmatprep.subr.bf16.mxu0 0
  %458 = vmatpush2.bf16.msra.mxu0 0
  %459 = vmatprep.subr.bf16.mxu0 0
  %460 = vmatpush2.bf16.msra.mxu0 0
  %461 = vmatprep.subr.bf16.mxu0 0
  %462 = vmatpush2.bf16.msra.mxu0 0
  %463 = vmatprep.subr.bf16.mxu0 0
  %464 = vmatpush2.bf16.msra.mxu0 0
  %465 = vmatprep.subr.bf16.mxu0 0
  %466 = vmatpush2.bf16.msra.mxu0 0
  %467 = vmatprep.subr.bf16.mxu0 0
  %468 = vmatpush2.bf16.msra.mxu0 0
  %469 = vmatprep.subr.bf16.mxu0 0
  %470 = vmatpush2.bf16.msra.mxu0 0
  %471 = vmatprep.subr.bf16.mxu0 0
  %472 = vmatpush2.bf16.msra.mxu0 0
  %473 = vmatprep.mubr.bf16.mxu0 0
  %474 = vmatmul.mubr.bf16.gmra.mxu0 %v15
  %v475 = vpop.f32.mrf.mxu0
  %v476 = vadd.f32 0.0, %v475
  %v477 = vpop.f32.mrf.mxu0
  %v478 = vadd.f32 0.0, %v477
  %v479 = vpop.f32.mrf.mxu0
  %v480 = vpop.f32.mrf.mxu0
  %481 = vdwg.mxu0
  %482 = vmatprep.subr.bf16.mxu0 %v333
  %483 = vmatpush1.bf16.msra.mxu0 %v332
  %484 = vmatprep.subr.bf16.mxu0 %v325
  %485 = vmatpush1.bf16.msra.mxu0 %v324
  %486 = vmatprep.subr.bf16.mxu0 %v317
  %487 = vmatpush1.bf16.msra.mxu0 %v316
  %488 = vmatprep.subr.bf16.mxu0 %v309
  %489 = vmatpush1.bf16.msra.mxu0 %v308
  %490 = vmatprep.subr.bf16.mxu0 %v301
  %491 = vmatpush1.bf16.msra.mxu0 %v300
  %492 = vmatprep.subr.bf16.mxu0 %v293
  %493 = vmatpush1.bf16.msra.mxu0 %v292
  %494 = vmatprep.subr.bf16.mxu0 %v285
  %495 = vmatpush1.bf16.msra.mxu0 %v284
  %496 = vmatprep.subr.bf16.mxu0 %v277
  %497 = vmatpush1.bf16.msra.mxu0 %v276
  %498 = vmatprep.subr.bf16.mxu0 0
  %499 = vmatpush2.bf16.msra.mxu0 0
  %500 = vmatprep.subr.bf16.mxu0 0
  %501 = vmatpush2.bf16.msra.mxu0 0
  %502 = vmatprep.subr.bf16.mxu0 0
  %503 = vmatpush2.bf16.msra.mxu0 0
  %504 = vmatprep.subr.bf16.mxu0 0
  %505 = vmatpush2.bf16.msra.mxu0 0
  %506 = vmatprep.subr.bf16.mxu0 0
  %507 = vmatpush2.bf16.msra.mxu0 0
  %508 = vmatprep.subr.bf16.mxu0 0
  %509 = vmatpush2.bf16.msra.mxu0 0
  %510 = vmatprep.subr.bf16.mxu0 0
  %511 = vmatpush2.bf16.msra.mxu0 0
  %512 = vmatprep.subr.bf16.mxu0 0
  %513 = vmatpush2.bf16.msra.mxu0 0
  %514 = vmatprep.mubr.bf16.mxu0 0
  %515 = vmatmul.mubr.bf16.gmra.mxu0 %v15
  %v516 = vpop.f32.mrf.mxu0
  %v517 = vadd.f32 0.0, %v516
  %v518 = vpop.f32.mrf.mxu0
  %v519 = vadd.f32 0.0, %v518
  %v520 = vpop.f32.mrf.mxu0
  %v521 = vpop.f32.mrf.mxu0
  %522 = vdwg.mxu0
  %523 = vmatprep.subr.bf16.mxu0 %v335
  %524 = vmatpush1.bf16.msra.mxu0 %v334
  %525 = vmatprep.subr.bf16.mxu0 %v327
  %526 = vmatpush1.bf16.msra.mxu0 %v326
  %527 = vmatprep.subr.bf16.mxu0 %v319
  %528 = vmatpush1.bf16.msra.mxu0 %v318
  %529 = vmatprep.subr.bf16.mxu0 %v311
  %530 = vmatpush1.bf16.msra.mxu0 %v310
  %531 = vmatprep.subr.bf16.mxu0 %v303
  %532 = vmatpush1.bf16.msra.mxu0 %v302
  %533 = vmatprep.subr.bf16.mxu0 %v295
  %534 = vmatpush1.bf16.msra.mxu0 %v294
  %535 = vmatprep.subr.bf16.mxu0 %v287
  %536 = vmatpush1.bf16.msra.mxu0 %v286
  %537 = vmatprep.subr.bf16.mxu0 %v279
  %538 = vmatpush1.bf16.msra.mxu0 %v278
  %539 = vmatprep.subr.bf16.mxu0 0
  %540 = vmatpush2.bf16.msra.mxu0 0
  %541 = vmatprep.subr.bf16.mxu0 0
  %542 = vmatpush2.bf16.msra.mxu0 0
  %543 = vmatprep.subr.bf16.mxu0 0
  %544 = vmatpush2.bf16.msra.mxu0 0
  %545 = vmatprep.subr.bf16.mxu0 0
  %546 = vmatpush2.bf16.msra.mxu0 0
  %547 = vmatprep.subr.bf16.mxu0 0
  %548 = vmatpush2.bf16.msra.mxu0 0
  %549 = vmatprep.subr.bf16.mxu0 0
  %550 = vmatpush2.bf16.msra.mxu0 0
  %551 = vmatprep.subr.bf16.mxu0 0
  %552 = vmatpush2.bf16.msra.mxu0 0
  %553 = vmatprep.subr.bf16.mxu0 0
  %554 = vmatpush2.bf16.msra.mxu0 0
  %555 = vmatprep.mubr.bf16.mxu0 0
  %556 = vmatmul.mubr.bf16.gmra.mxu0 %v15
  %v557 = vpop.f32.mrf.mxu0
  %v558 = vadd.f32 0.0, %v557
  %v559 = vpop.f32.mrf.mxu0
  %v560 = vadd.f32 0.0, %v559
  %v561 = vpop.f32.mrf.mxu0
  %v562 = vpop.f32.mrf.mxu0
  %563 = vdwg.mxu0
  %v564 = vld [vmem:[%s2] sm:$0xff]
  %v565 = vld [vmem:[%s2 + $0x8] sm:$0xff]
  %v566 = vld [vmem:[%s2 + $0x10] sm:$0xff]
  %v567 = vld [vmem:[%s2 + $0x18] sm:$0xff]
  %v568 = vld [vmem:[%s2 + $0x20] sm:$0xff]
  %v569 = vld [vmem:[%s2 + $0x28] sm:$0xff]
  %v570 = vld [vmem:[%s2 + $0x30] sm:$0xff]
  %v571 = vld [vmem:[%s2 + $0x38] sm:$0xff]
  %v572 = vld [vmem:[%s2 + $0x40] sm:$0xff]
  %v573 = vld [vmem:[%s2 + $0x48] sm:$0xff]
  %v574 = vld [vmem:[%s2 + $0x50] sm:$0xff]
  %v575 = vld [vmem:[%s2 + $0x58] sm:$0xff]
  %v576 = vld [vmem:[%s2 + $0x60] sm:$0xff]
  %v577 = vld [vmem:[%s2 + $0x68] sm:$0xff]
  %v578 = vld [vmem:[%s2 + $0x70] sm:$0xff]
  %v579 = vld [vmem:[%s2 + $0x78] sm:$0xff]
  %v580 = vld [vmem:[%s2 + $0x80] sm:$0xff]
  %v581 = vld [vmem:[%s2 + $0x88] sm:$0xff]
  %v582 = vld [vmem:[%s2 + $0x90] sm:$0xff]
  %v583 = vld [vmem:[%s2 + $0x98] sm:$0xff]
  %v584 = vld [vmem:[%s2 + $0xa0] sm:$0xff]
  %v585 = vld [vmem:[%s2 + $0xa8] sm:$0xff]
  %v586 = vld [vmem:[%s2 + $0xb0] sm:$0xff]
  %v587 = vld [vmem:[%s2 + $0xb8] sm:$0xff]
  %v588 = vld [vmem:[%s2 + $0xc0] sm:$0xff]
  %v589 = vld [vmem:[%s2 + $0xc8] sm:$0xff]
  %v590 = vld [vmem:[%s2 + $0xd0] sm:$0xff]
  %v591 = vld [vmem:[%s2 + $0xd8] sm:$0xff]
  %v592 = vld [vmem:[%s2 + $0xe0] sm:$0xff]
  %v593 = vld [vmem:[%s2 + $0xe8] sm:$0xff]
  %v594 = vld [vmem:[%s2 + $0xf0] sm:$0xff]
  %v595 = vld [vmem:[%s2 + $0xf8] sm:$0xff]
  %v596 = vld [vmem:[%s2 + $0x100] sm:$0xff]
  %v597 = vld [vmem:[%s2 + $0x108] sm:$0xff]
  %v598 = vld [vmem:[%s2 + $0x110] sm:$0xff]
  %v599 = vld [vmem:[%s2 + $0x118] sm:$0xff]
  %v600 = vld [vmem:[%s2 + $0x120] sm:$0xff]
  %v601 = vld [vmem:[%s2 + $0x128] sm:$0xff]
  %v602 = vld [vmem:[%s2 + $0x130] sm:$0xff]
  %v603 = vld [vmem:[%s2 + $0x138] sm:$0xff]
  %v604 = vld [vmem:[%s2 + $0x140] sm:$0xff]
  %v605 = vld [vmem:[%s2 + $0x148] sm:$0xff]
  %v606 = vld [vmem:[%s2 + $0x150] sm:$0xff]
  %v607 = vld [vmem:[%s2 + $0x158] sm:$0xff]
  %v608 = vld [vmem:[%s2 + $0x160] sm:$0xff]
  %v609 = vld [vmem:[%s2 + $0x168] sm:$0xff]
  %v610 = vld [vmem:[%s2 + $0x170] sm:$0xff]
  %v611 = vld [vmem:[%s2 + $0x178] sm:$0xff]
  %v612 = vld [vmem:[%s2 + $0x180] sm:$0xff]
  %v613 = vld [vmem:[%s2 + $0x188] sm:$0xff]
  %v614 = vld [vmem:[%s2 + $0x190] sm:$0xff]
  %v615 = vld [vmem:[%s2 + $0x198] sm:$0xff]
  %v616 = vld [vmem:[%s2 + $0x1a0] sm:$0xff]
  %v617 = vld [vmem:[%s2 + $0x1a8] sm:$0xff]
  %v618 = vld [vmem:[%s2 + $0x1b0] sm:$0xff]
  %v619 = vld [vmem:[%s2 + $0x1b8] sm:$0xff]
  %v620 = vld [vmem:[%s2 + $0x1c0] sm:$0xff]
  %v621 = vld [vmem:[%s2 + $0x1c8] sm:$0xff]
  %v622 = vld [vmem:[%s2 + $0x1d0] sm:$0xff]
  %v623 = vld [vmem:[%s2 + $0x1d8] sm:$0xff]
  %v624 = vld [vmem:[%s2 + $0x1e0] sm:$0xff]
  %v625 = vld [vmem:[%s2 + $0x1e8] sm:$0xff]
  %v626 = vld [vmem:[%s2 + $0x1f0] sm:$0xff]
  %v627 = vld [vmem:[%s2 + $0x1f8] sm:$0xff]
  %v628 = vld [vmem:[%s2 + $0x200] sm:$0xff]
  %v629 = vld [vmem:[%s2 + $0x208] sm:$0xff]
  %v630 = vld [vmem:[%s2 + $0x210] sm:$0xff]
  %v631 = vld [vmem:[%s2 + $0x218] sm:$0xff]
  %v632 = vld [vmem:[%s2 + $0x220] sm:$0xff]
  %v633 = vld [vmem:[%s2 + $0x228] sm:$0xff]
  %v634 = vld [vmem:[%s2 + $0x230] sm:$0xff]
  %v635 = vld [vmem:[%s2 + $0x238] sm:$0xff]
  %v636 = vld [vmem:[%s2 + $0x240] sm:$0xff]
  %v637 = vld [vmem:[%s2 + $0x248] sm:$0xff]
  %v638 = vld [vmem:[%s2 + $0x250] sm:$0xff]
  %v639 = vld [vmem:[%s2 + $0x258] sm:$0xff]
  %v640 = vld [vmem:[%s2 + $0x260] sm:$0xff]
  %v641 = vld [vmem:[%s2 + $0x268] sm:$0xff]
  %v642 = vld [vmem:[%s2 + $0x270] sm:$0xff]
  %v643 = vld [vmem:[%s2 + $0x278] sm:$0xff]
  %v644 = vld [vmem:[%s2 + $0x280] sm:$0xff]
  %v645 = vld [vmem:[%s2 + $0x288] sm:$0xff]
  %v646 = vld [vmem:[%s2 + $0x290] sm:$0xff]
  %v647 = vld [vmem:[%s2 + $0x298] sm:$0xff]
  %v648 = vld [vmem:[%s2 + $0x2a0] sm:$0xff]
  %v649 = vld [vmem:[%s2 + $0x2a8] sm:$0xff]
  %v650 = vld [vmem:[%s2 + $0x2b0] sm:$0xff]
  %v651 = vld [vmem:[%s2 + $0x2b8] sm:$0xff]
  %v652 = vld [vmem:[%s2 + $0x2c0] sm:$0xff]
  %v653 = vld [vmem:[%s2 + $0x2c8] sm:$0xff]
  %v654 = vld [vmem:[%s2 + $0x2d0] sm:$0xff]
  %v655 = vld [vmem:[%s2 + $0x2d8] sm:$0xff]
  %v656 = vld [vmem:[%s2 + $0x2e0] sm:$0xff]
  %v657 = vld [vmem:[%s2 + $0x2e8] sm:$0xff]
  %v658 = vld [vmem:[%s2 + $0x2f0] sm:$0xff]
  %v659 = vld [vmem:[%s2 + $0x2f8] sm:$0xff]
  %v660 = vld [vmem:[%s2 + $0x300] sm:$0xff]
  %v661 = vld [vmem:[%s2 + $0x308] sm:$0xff]
  %v662 = vld [vmem:[%s2 + $0x310] sm:$0xff]
  %v663 = vld [vmem:[%s2 + $0x318] sm:$0xff]
  %v664 = vld [vmem:[%s2 + $0x320] sm:$0xff]
  %v665 = vld [vmem:[%s2 + $0x328] sm:$0xff]
  %v666 = vld [vmem:[%s2 + $0x330] sm:$0xff]
  %v667 = vld [vmem:[%s2 + $0x338] sm:$0xff]
  %v668 = vld [vmem:[%s2 + $0x340] sm:$0xff]
  %v669 = vld [vmem:[%s2 + $0x348] sm:$0xff]
  %v670 = vld [vmem:[%s2 + $0x350] sm:$0xff]
  %v671 = vld [vmem:[%s2 + $0x358] sm:$0xff]
  %v672 = vld [vmem:[%s2 + $0x360] sm:$0xff]
  %v673 = vld [vmem:[%s2 + $0x368] sm:$0xff]
  %v674 = vld [vmem:[%s2 + $0x370] sm:$0xff]
  %v675 = vld [vmem:[%s2 + $0x378] sm:$0xff]
  %v676 = vld [vmem:[%s2 + $0x380] sm:$0xff]
  %v677 = vld [vmem:[%s2 + $0x388] sm:$0xff]
  %v678 = vld [vmem:[%s2 + $0x390] sm:$0xff]
  %v679 = vld [vmem:[%s2 + $0x398] sm:$0xff]
  %v680 = vld [vmem:[%s2 + $0x3a0] sm:$0xff]
  %v681 = vld [vmem:[%s2 + $0x3a8] sm:$0xff]
  %v682 = vld [vmem:[%s2 + $0x3b0] sm:$0xff]
  %v683 = vld [vmem:[%s2 + $0x3b8] sm:$0xff]
  %v684 = vld [vmem:[%s2 + $0x3c0] sm:$0xff]
  %v685 = vld [vmem:[%s2 + $0x3c8] sm:$0xff]
  %v686 = vld [vmem:[%s2 + $0x3d0] sm:$0xff]
  %v687 = vld [vmem:[%s2 + $0x3d8] sm:$0xff]
  %v688 = vld [vmem:[%s2 + $0x3e0] sm:$0xff]
  %v689 = vld [vmem:[%s2 + $0x3e8] sm:$0xff]
  %v690 = vld [vmem:[%s2 + $0x3f0] sm:$0xff]
  %v691 = vld [vmem:[%s2 + $0x3f8] sm:$0xff]
  %692 = vmatprep.subr.mxu0 0.0
  %693 = vmatpush1.msra.mxu0 %v579
  %694 = vmatprep.subr.mxu0 0.0
  %695 = vmatpush1.msra.mxu0 %v578
  %696 = vmatprep.subr.mxu0 0.0
  %697 = vmatpush1.msra.mxu0 %v577
  %698 = vmatprep.subr.mxu0 0.0
  %699 = vmatpush1.msra.mxu0 %v576
  %700 = vmatprep.subr.mxu0 0.0
  %701 = vmatpush1.msra.mxu0 %v575
  %702 = vmatprep.subr.mxu0 0.0
  %703 = vmatpush1.msra.mxu0 %v574
  %704 = vmatprep.subr.mxu0 0.0
  %705 = vmatpush1.msra.mxu0 %v573
  %706 = vmatprep.subr.mxu0 0.0
  %707 = vmatpush1.msra.mxu0 %v572
  %708 = vmatprep.subr.mxu0 0.0
  %709 = vmatpush1.msra.mxu0 %v571
  %710 = vmatprep.subr.mxu0 0.0
  %711 = vmatpush1.msra.mxu0 %v570
  %712 = vmatprep.subr.mxu0 0.0
  %713 = vmatpush1.msra.mxu0 %v569
  %714 = vmatprep.subr.mxu0 0.0
  %715 = vmatpush1.msra.mxu0 %v568
  %716 = vmatprep.subr.mxu0 0.0
  %717 = vmatpush1.msra.mxu0 %v567
  %718 = vmatprep.subr.mxu0 0.0
  %719 = vmatpush1.msra.mxu0 %v566
  %720 = vmatprep.subr.mxu0 0.0
  %721 = vmatpush1.msra.mxu0 %v565
  %722 = vmatprep.subr.mxu0 0.0
  %723 = vmatpush1.msra.mxu0 %v564
  %724 = vmatprep.subr.mxu0 0.0
  %725 = vmatpush2.msra.mxu0 %v595
  %726 = vmatprep.subr.mxu0 0.0
  %727 = vmatpush2.msra.mxu0 %v594
  %728 = vmatprep.subr.mxu0 0.0
  %729 = vmatpush2.msra.mxu0 %v593
  %730 = vmatprep.subr.mxu0 0.0
  %731 = vmatpush2.msra.mxu0 %v592
  %732 = vmatprep.subr.mxu0 0.0
  %733 = vmatpush2.msra.mxu0 %v591
  %734 = vmatprep.subr.mxu0 0.0
  %735 = vmatpush2.msra.mxu0 %v590
  %736 = vmatprep.subr.mxu0 0.0
  %737 = vmatpush2.msra.mxu0 %v589
  %738 = vmatprep.subr.mxu0 0.0
  %739 = vmatpush2.msra.mxu0 %v588
  %740 = vmatprep.subr.mxu0 0.0
  %741 = vmatpush2.msra.mxu0 %v587
  %742 = vmatprep.subr.mxu0 0.0
  %743 = vmatpush2.msra.mxu0 %v586
  %744 = vmatprep.subr.mxu0 0.0
  %745 = vmatpush2.msra.mxu0 %v585
  %746 = vmatprep.subr.mxu0 0.0
  %747 = vmatpush2.msra.mxu0 %v584
  %748 = vmatprep.subr.mxu0 0.0
  %749 = vmatpush2.msra.mxu0 %v583
  %750 = vmatprep.subr.mxu0 0.0
  %751 = vmatpush2.msra.mxu0 %v582
  %752 = vmatprep.subr.mxu0 0.0
  %753 = vmatpush2.msra.mxu0 %v581
  %754 = vmatprep.subr.mxu0 0.0
  %755 = vmatpush2.msra.mxu0 %v580
  %756 = vmatprep.mubr.f32.mxu0 %v437
  %757 = vmatmul.mubr.f32.gmra.mxu0 %v435
  %v758 = vpop.f32.mrf.mxu0
  %v759 = vadd.f32 0.0, %v758
  %v760 = vpop.f32.mrf.mxu0
  %761 = vdwg.mxu0
  %762 = vmatprep.subr.mxu0 0.0
  %763 = vmatpush1.msra.mxu0 %v611
  %764 = vmatprep.subr.mxu0 0.0
  %765 = vmatpush1.msra.mxu0 %v610
  %766 = vmatprep.subr.mxu0 0.0
  %767 = vmatpush1.msra.mxu0 %v609
  %768 = vmatprep.subr.mxu0 0.0
  %769 = vmatpush1.msra.mxu0 %v608
  %770 = vmatprep.subr.mxu0 0.0
  %771 = vmatpush1.msra.mxu0 %v607
  %772 = vmatprep.subr.mxu0 0.0
  %773 = vmatpush1.msra.mxu0 %v606
  %774 = vmatprep.subr.mxu0 0.0
  %775 = vmatpush1.msra.mxu0 %v605
  %776 = vmatprep.subr.mxu0 0.0
  %777 = vmatpush1.msra.mxu0 %v604
  %778 = vmatprep.subr.mxu0 0.0
  %779 = vmatpush1.msra.mxu0 %v603
  %780 = vmatprep.subr.mxu0 0.0
  %781 = vmatpush1.msra.mxu0 %v602
  %782 = vmatprep.subr.mxu0 0.0
  %783 = vmatpush1.msra.mxu0 %v601
  %784 = vmatprep.subr.mxu0 0.0
  %785 = vmatpush1.msra.mxu0 %v600
  %786 = vmatprep.subr.mxu0 0.0
  %787 = vmatpush1.msra.mxu0 %v599
  %788 = vmatprep.subr.mxu0 0.0
  %789 = vmatpush1.msra.mxu0 %v598
  %790 = vmatprep.subr.mxu0 0.0
  %791 = vmatpush1.msra.mxu0 %v597
  %792 = vmatprep.subr.mxu0 0.0
  %793 = vmatpush1.msra.mxu0 %v596
  %794 = vmatprep.subr.mxu0 0.0
  %795 = vmatpush2.msra.mxu0 %v627
  %796 = vmatprep.subr.mxu0 0.0
  %797 = vmatpush2.msra.mxu0 %v626
  %798 = vmatprep.subr.mxu0 0.0
  %799 = vmatpush2.msra.mxu0 %v625
  %800 = vmatprep.subr.mxu0 0.0
  %801 = vmatpush2.msra.mxu0 %v624
  %802 = vmatprep.subr.mxu0 0.0
  %803 = vmatpush2.msra.mxu0 %v623
  %804 = vmatprep.subr.mxu0 0.0
  %805 = vmatpush2.msra.mxu0 %v622
  %806 = vmatprep.subr.mxu0 0.0
  %807 = vmatpush2.msra.mxu0 %v621
  %808 = vmatprep.subr.mxu0 0.0
  %809 = vmatpush2.msra.mxu0 %v620
  %810 = vmatprep.subr.mxu0 0.0
  %811 = vmatpush2.msra.mxu0 %v619
  %812 = vmatprep.subr.mxu0 0.0
  %813 = vmatpush2.msra.mxu0 %v618
  %814 = vmatprep.subr.mxu0 0.0
  %815 = vmatpush2.msra.mxu0 %v617
  %816 = vmatprep.subr.mxu0 0.0
  %817 = vmatpush2.msra.mxu0 %v616
  %818 = vmatprep.subr.mxu0 0.0
  %819 = vmatpush2.msra.mxu0 %v615
  %820 = vmatprep.subr.mxu0 0.0
  %821 = vmatpush2.msra.mxu0 %v614
  %822 = vmatprep.subr.mxu0 0.0
  %823 = vmatpush2.msra.mxu0 %v613
  %824 = vmatprep.subr.mxu0 0.0
  %825 = vmatpush2.msra.mxu0 %v612
  %826 = vmatprep.mubr.f32.mxu0 %v478
  %827 = vmatmul.mubr.f32.gmra.mxu0 %v476
  %v828 = vpop.f32.mrf.mxu0
  %v829 = vadd.f32 %v759, %v828
  %v830 = vpop.f32.mrf.mxu0
  %831 = vdwg.mxu0
  %832 = vmatprep.subr.mxu0 0.0
  %833 = vmatpush1.msra.mxu0 %v643
  %834 = vmatprep.subr.mxu0 0.0
  %835 = vmatpush1.msra.mxu0 %v642
  %836 = vmatprep.subr.mxu0 0.0
  %837 = vmatpush1.msra.mxu0 %v641
  %838 = vmatprep.subr.mxu0 0.0
  %839 = vmatpush1.msra.mxu0 %v640
  %840 = vmatprep.subr.mxu0 0.0
  %841 = vmatpush1.msra.mxu0 %v639
  %842 = vmatprep.subr.mxu0 0.0
  %843 = vmatpush1.msra.mxu0 %v638
  %844 = vmatprep.subr.mxu0 0.0
  %845 = vmatpush1.msra.mxu0 %v637
  %846 = vmatprep.subr.mxu0 0.0
  %847 = vmatpush1.msra.mxu0 %v636
  %848 = vmatprep.subr.mxu0 0.0
  %849 = vmatpush1.msra.mxu0 %v635
  %850 = vmatprep.subr.mxu0 0.0
  %851 = vmatpush1.msra.mxu0 %v634
  %852 = vmatprep.subr.mxu0 0.0
  %853 = vmatpush1.msra.mxu0 %v633
  %854 = vmatprep.subr.mxu0 0.0
  %855 = vmatpush1.msra.mxu0 %v632
  %856 = vmatprep.subr.mxu0 0.0
  %857 = vmatpush1.msra.mxu0 %v631
  %858 = vmatprep.subr.mxu0 0.0
  %859 = vmatpush1.msra.mxu0 %v630
  %860 = vmatprep.subr.mxu0 0.0
  %861 = vmatpush1.msra.mxu0 %v629
  %862 = vmatprep.subr.mxu0 0.0
  %863 = vmatpush1.msra.mxu0 %v628
  %864 = vmatprep.subr.mxu0 0.0
  %865 = vmatpush2.msra.mxu0 %v659
  %866 = vmatprep.subr.mxu0 0.0
  %867 = vmatpush2.msra.mxu0 %v658
  %868 = vmatprep.subr.mxu0 0.0
  %869 = vmatpush2.msra.mxu0 %v657
  %870 = vmatprep.subr.mxu0 0.0
  %871 = vmatpush2.msra.mxu0 %v656
  %872 = vmatprep.subr.mxu0 0.0
  %873 = vmatpush2.msra.mxu0 %v655
  %874 = vmatprep.subr.mxu0 0.0
  %875 = vmatpush2.msra.mxu0 %v654
  %876 = vmatprep.subr.mxu0 0.0
  %877 = vmatpush2.msra.mxu0 %v653
  %878 = vmatprep.subr.mxu0 0.0
  %879 = vmatpush2.msra.mxu0 %v652
  %880 = vmatprep.subr.mxu0 0.0
  %881 = vmatpush2.msra.mxu0 %v651
  %882 = vmatprep.subr.mxu0 0.0
  %883 = vmatpush2.msra.mxu0 %v650
  %884 = vmatprep.subr.mxu0 0.0
  %885 = vmatpush2.msra.mxu0 %v649
  %886 = vmatprep.subr.mxu0 0.0
  %887 = vmatpush2.msra.mxu0 %v648
  %888 = vmatprep.subr.mxu0 0.0
  %889 = vmatpush2.msra.mxu0 %v647
  %890 = vmatprep.subr.mxu0 0.0
  %891 = vmatpush2.msra.mxu0 %v646
  %892 = vmatprep.subr.mxu0 0.0
  %893 = vmatpush2.msra.mxu0 %v645
  %894 = vmatprep.subr.mxu0 0.0
  %895 = vmatpush2.msra.mxu0 %v644
  %896 = vmatprep.mubr.f32.mxu0 %v519
  %897 = vmatmul.mubr.f32.gmra.mxu0 %v517
  %v898 = vpop.f32.mrf.mxu0
  %v899 = vadd.f32 %v829, %v898
  %v900 = vpop.f32.mrf.mxu0
  %901 = vdwg.mxu0
  %902 = vmatprep.subr.mxu0 0.0
  %903 = vmatpush1.msra.mxu0 %v675
  %904 = vmatprep.subr.mxu0 0.0
  %905 = vmatpush1.msra.mxu0 %v674
  %906 = vmatprep.subr.mxu0 0.0
  %907 = vmatpush1.msra.mxu0 %v673
  %908 = vmatprep.subr.mxu0 0.0
  %909 = vmatpush1.msra.mxu0 %v672
  %910 = vmatprep.subr.mxu0 0.0
  %911 = vmatpush1.msra.mxu0 %v671
  %912 = vmatprep.subr.mxu0 0.0
  %913 = vmatpush1.msra.mxu0 %v670
  %914 = vmatprep.subr.mxu0 0.0
  %915 = vmatpush1.msra.mxu0 %v669
  %916 = vmatprep.subr.mxu0 0.0
  %917 = vmatpush1.msra.mxu0 %v668
  %918 = vmatprep.subr.mxu0 0.0
  %919 = vmatpush1.msra.mxu0 %v667
  %920 = vmatprep.subr.mxu0 0.0
  %921 = vmatpush1.msra.mxu0 %v666
  %922 = vmatprep.subr.mxu0 0.0
  %923 = vmatpush1.msra.mxu0 %v665
  %924 = vmatprep.subr.mxu0 0.0
  %925 = vmatpush1.msra.mxu0 %v664
  %926 = vmatprep.subr.mxu0 0.0
  %927 = vmatpush1.msra.mxu0 %v663
  %928 = vmatprep.subr.mxu0 0.0
  %929 = vmatpush1.msra.mxu0 %v662
  %930 = vmatprep.subr.mxu0 0.0
  %931 = vmatpush1.msra.mxu0 %v661
  %932 = vmatprep.subr.mxu0 0.0
  %933 = vmatpush1.msra.mxu0 %v660
  %934 = vmatprep.subr.mxu0 0.0
  %935 = vmatpush2.msra.mxu0 %v691
  %936 = vmatprep.subr.mxu0 0.0
  %937 = vmatpush2.msra.mxu0 %v690
  %938 = vmatprep.subr.mxu0 0.0
  %939 = vmatpush2.msra.mxu0 %v689
  %940 = vmatprep.subr.mxu0 0.0
  %941 = vmatpush2.msra.mxu0 %v688
  %942 = vmatprep.subr.mxu0 0.0
  %943 = vmatpush2.msra.mxu0 %v687
  %944 = vmatprep.subr.mxu0 0.0
  %945 = vmatpush2.msra.mxu0 %v686
  %946 = vmatprep.subr.mxu0 0.0
  %947 = vmatpush2.msra.mxu0 %v685
  %948 = vmatprep.subr.mxu0 0.0
  %949 = vmatpush2.msra.mxu0 %v684
  %950 = vmatprep.subr.mxu0 0.0
  %951 = vmatpush2.msra.mxu0 %v683
  %952 = vmatprep.subr.mxu0 0.0
  %953 = vmatpush2.msra.mxu0 %v682
  %954 = vmatprep.subr.mxu0 0.0
  %955 = vmatpush2.msra.mxu0 %v681
  %956 = vmatprep.subr.mxu0 0.0
  %957 = vmatpush2.msra.mxu0 %v680
  %958 = vmatprep.subr.mxu0 0.0
  %959 = vmatpush2.msra.mxu0 %v679
  %960 = vmatprep.subr.mxu0 0.0
  %961 = vmatpush2.msra.mxu0 %v678
  %962 = vmatprep.subr.mxu0 0.0
  %963 = vmatpush2.msra.mxu0 %v677
  %964 = vmatprep.subr.mxu0 0.0
  %965 = vmatpush2.msra.mxu0 %v676
  %966 = vmatprep.mubr.f32.mxu0 %v560
  %967 = vmatmul.mubr.f32.gmra.mxu0 %v558
  %v968 = vpop.f32.mrf.mxu0
  %v969 = vadd.f32 %v899, %v968
  %v970 = vpop.f32.mrf.mxu0
  %971 = vdwg.mxu0
  %v972 = vmul.f32 %v435, %v435
  %v973 = vmul.f32 %v437, %v437
  %v974 = vmul.f32 %v476, %v476
  %v975 = vmul.f32 %v478, %v478
  %v976 = vmul.f32 %v517, %v517
  %v977 = vmul.f32 %v519, %v519
  %v978 = vmul.f32 %v558, %v558
  %v979 = vmul.f32 %v560, %v560
  %980 = vmatprep.subr.mxu0 0.0
  %981 = vmatpush1.msra.mxu0 %v579
  %982 = vmatprep.subr.mxu0 0.0
  %983 = vmatpush1.msra.mxu0 %v578
  %984 = vmatprep.subr.mxu0 0.0
  %985 = vmatpush1.msra.mxu0 %v577
  %986 = vmatprep.subr.mxu0 0.0
  %987 = vmatpush1.msra.mxu0 %v576
  %988 = vmatprep.subr.mxu0 0.0
  %989 = vmatpush1.msra.mxu0 %v575
  %990 = vmatprep.subr.mxu0 0.0
  %991 = vmatpush1.msra.mxu0 %v574
  %992 = vmatprep.subr.mxu0 0.0
  %993 = vmatpush1.msra.mxu0 %v573
  %994 = vmatprep.subr.mxu0 0.0
  %995 = vmatpush1.msra.mxu0 %v572
  %996 = vmatprep.subr.mxu0 0.0
  %997 = vmatpush1.msra.mxu0 %v571
  %998 = vmatprep.subr.mxu0 0.0
  %999 = vmatpush1.msra.mxu0 %v570
  %1000 = vmatprep.subr.mxu0 0.0
  %1001 = vmatpush1.msra.mxu0 %v569
  %1002 = vmatprep.subr.mxu0 0.0
  %1003 = vmatpush1.msra.mxu0 %v568
  %1004 = vmatprep.subr.mxu0 0.0
  %1005 = vmatpush1.msra.mxu0 %v567
  %1006 = vmatprep.subr.mxu0 0.0
  %1007 = vmatpush1.msra.mxu0 %v566
  %1008 = vmatprep.subr.mxu0 0.0
  %1009 = vmatpush1.msra.mxu0 %v565
  %1010 = vmatprep.subr.mxu0 0.0
  %1011 = vmatpush1.msra.mxu0 %v564
  %1012 = vmatprep.subr.mxu0 0.0
  %1013 = vmatpush2.msra.mxu0 %v595
  %1014 = vmatprep.subr.mxu0 0.0
  %1015 = vmatpush2.msra.mxu0 %v594
  %1016 = vmatprep.subr.mxu0 0.0
  %1017 = vmatpush2.msra.mxu0 %v593
  %1018 = vmatprep.subr.mxu0 0.0
  %1019 = vmatpush2.msra.mxu0 %v592
  %1020 = vmatprep.subr.mxu0 0.0
  %1021 = vmatpush2.msra.mxu0 %v591
  %1022 = vmatprep.subr.mxu0 0.0
  %1023 = vmatpush2.msra.mxu0 %v590
  %1024 = vmatprep.subr.mxu0 0.0
  %1025 = vmatpush2.msra.mxu0 %v589
  %1026 = vmatprep.subr.mxu0 0.0
  %1027 = vmatpush2.msra.mxu0 %v588
  %1028 = vmatprep.subr.mxu0 0.0
  %1029 = vmatpush2.msra.mxu0 %v587
  %1030 = vmatprep.subr.mxu0 0.0
  %1031 = vmatpush2.msra.mxu0 %v586
  %1032 = vmatprep.subr.mxu0 0.0
  %1033 = vmatpush2.msra.mxu0 %v585
  %1034 = vmatprep.subr.mxu0 0.0
  %1035 = vmatpush2.msra.mxu0 %v584
  %1036 = vmatprep.subr.mxu0 0.0
  %1037 = vmatpush2.msra.mxu0 %v583
  %1038 = vmatprep.subr.mxu0 0.0
  %1039 = vmatpush2.msra.mxu0 %v582
  %1040 = vmatprep.subr.mxu0 0.0
  %1041 = vmatpush2.msra.mxu0 %v581
  %1042 = vmatprep.subr.mxu0 0.0
  %1043 = vmatpush2.msra.mxu0 %v580
  %1044 = vmatprep.mubr.f32.mxu0 %v973
  %1045 = vmatmul.mubr.f32.gmra.mxu0 %v972
  %v1046 = vpop.f32.mrf.mxu0
  %v1047 = vadd.f32 0.0, %v1046
  %v1048 = vpop.f32.mrf.mxu0
  %1049 = vdwg.mxu0
  %1050 = vmatprep.subr.mxu0 0.0
  %1051 = vmatpush1.msra.mxu0 %v611
  %1052 = vmatprep.subr.mxu0 0.0
  %1053 = vmatpush1.msra.mxu0 %v610
  %1054 = vmatprep.subr.mxu0 0.0
  %1055 = vmatpush1.msra.mxu0 %v609
  %1056 = vmatprep.subr.mxu0 0.0
  %1057 = vmatpush1.msra.mxu0 %v608
  %1058 = vmatprep.subr.mxu0 0.0
  %1059 = vmatpush1.msra.mxu0 %v607
  %1060 = vmatprep.subr.mxu0 0.0
  %1061 = vmatpush1.msra.mxu0 %v606
  %1062 = vmatprep.subr.mxu0 0.0
  %1063 = vmatpush1.msra.mxu0 %v605
  %1064 = vmatprep.subr.mxu0 0.0
  %1065 = vmatpush1.msra.mxu0 %v604
  %1066 = vmatprep.subr.mxu0 0.0
  %1067 = vmatpush1.msra.mxu0 %v603
  %1068 = vmatprep.subr.mxu0 0.0
  %1069 = vmatpush1.msra.mxu0 %v602
  %1070 = vmatprep.subr.mxu0 0.0
  %1071 = vmatpush1.msra.mxu0 %v601
  %1072 = vmatprep.subr.mxu0 0.0
  %1073 = vmatpush1.msra.mxu0 %v600
  %1074 = vmatprep.subr.mxu0 0.0
  %1075 = vmatpush1.msra.mxu0 %v599
  %1076 = vmatprep.subr.mxu0 0.0
  %1077 = vmatpush1.msra.mxu0 %v598
  %1078 = vmatprep.subr.mxu0 0.0
  %1079 = vmatpush1.msra.mxu0 %v597
  %1080 = vmatprep.subr.mxu0 0.0
  %1081 = vmatpush1.msra.mxu0 %v596
  %1082 = vmatprep.subr.mxu0 0.0
  %1083 = vmatpush2.msra.mxu0 %v627
  %1084 = vmatprep.subr.mxu0 0.0
  %1085 = vmatpush2.msra.mxu0 %v626
  %1086 = vmatprep.subr.mxu0 0.0
  %1087 = vmatpush2.msra.mxu0 %v625
  %1088 = vmatprep.subr.mxu0 0.0
  %1089 = vmatpush2.msra.mxu0 %v624
  %1090 = vmatprep.subr.mxu0 0.0
  %1091 = vmatpush2.msra.mxu0 %v623
  %1092 = vmatprep.subr.mxu0 0.0
  %1093 = vmatpush2.msra.mxu0 %v622
  %1094 = vmatprep.subr.mxu0 0.0
  %1095 = vmatpush2.msra.mxu0 %v621
  %1096 = vmatprep.subr.mxu0 0.0
  %1097 = vmatpush2.msra.mxu0 %v620
  %1098 = vmatprep.subr.mxu0 0.0
  %1099 = vmatpush2.msra.mxu0 %v619
  %1100 = vmatprep.subr.mxu0 0.0
  %1101 = vmatpush2.msra.mxu0 %v618
  %1102 = vmatprep.subr.mxu0 0.0
  %1103 = vmatpush2.msra.mxu0 %v617
  %1104 = vmatprep.subr.mxu0 0.0
  %1105 = vmatpush2.msra.mxu0 %v616
  %1106 = vmatprep.subr.mxu0 0.0
  %1107 = vmatpush2.msra.mxu0 %v615
  %1108 = vmatprep.subr.mxu0 0.0
  %1109 = vmatpush2.msra.mxu0 %v614
  %1110 = vmatprep.subr.mxu0 0.0
  %1111 = vmatpush2.msra.mxu0 %v613
  %1112 = vmatprep.subr.mxu0 0.0
  %1113 = vmatpush2.msra.mxu0 %v612
  %1114 = vmatprep.mubr.f32.mxu0 %v975
  %1115 = vmatmul.mubr.f32.gmra.mxu0 %v974
  %v1116 = vpop.f32.mrf.mxu0
  %v1117 = vadd.f32 %v1047, %v1116
  %v1118 = vpop.f32.mrf.mxu0
  %1119 = vdwg.mxu0
  %1120 = vmatprep.subr.mxu0 0.0
  %1121 = vmatpush1.msra.mxu0 %v643
  %1122 = vmatprep.subr.mxu0 0.0
  %1123 = vmatpush1.msra.mxu0 %v642
  %1124 = vmatprep.subr.mxu0 0.0
  %1125 = vmatpush1.msra.mxu0 %v641
  %1126 = vmatprep.subr.mxu0 0.0
  %1127 = vmatpush1.msra.mxu0 %v640
  %1128 = vmatprep.subr.mxu0 0.0
  %1129 = vmatpush1.msra.mxu0 %v639
  %1130 = vmatprep.subr.mxu0 0.0
  %1131 = vmatpush1.msra.mxu0 %v638
  %1132 = vmatprep.subr.mxu0 0.0
  %1133 = vmatpush1.msra.mxu0 %v637
  %1134 = vmatprep.subr.mxu0 0.0
  %1135 = vmatpush1.msra.mxu0 %v636
  %1136 = vmatprep.subr.mxu0 0.0
  %1137 = vmatpush1.msra.mxu0 %v635
  %1138 = vmatprep.subr.mxu0 0.0
  %1139 = vmatpush1.msra.mxu0 %v634
  %1140 = vmatprep.subr.mxu0 0.0
  %1141 = vmatpush1.msra.mxu0 %v633
  %1142 = vmatprep.subr.mxu0 0.0
  %1143 = vmatpush1.msra.mxu0 %v632
  %1144 = vmatprep.subr.mxu0 0.0
  %1145 = vmatpush1.msra.mxu0 %v631
  %1146 = vmatprep.subr.mxu0 0.0
  %1147 = vmatpush1.msra.mxu0 %v630
  %1148 = vmatprep.subr.mxu0 0.0
  %1149 = vmatpush1.msra.mxu0 %v629
  %1150 = vmatprep.subr.mxu0 0.0
  %1151 = vmatpush1.msra.mxu0 %v628
  %1152 = vmatprep.subr.mxu0 0.0
  %1153 = vmatpush2.msra.mxu0 %v659
  %1154 = vmatprep.subr.mxu0 0.0
  %1155 = vmatpush2.msra.mxu0 %v658
  %1156 = vmatprep.subr.mxu0 0.0
  %1157 = vmatpush2.msra.mxu0 %v657
  %1158 = vmatprep.subr.mxu0 0.0
  %1159 = vmatpush2.msra.mxu0 %v656
  %1160 = vmatprep.subr.mxu0 0.0
  %1161 = vmatpush2.msra.mxu0 %v655
  %1162 = vmatprep.subr.mxu0 0.0
  %1163 = vmatpush2.msra.mxu0 %v654
  %1164 = vmatprep.subr.mxu0 0.0
  %1165 = vmatpush2.msra.mxu0 %v653
  %1166 = vmatprep.subr.mxu0 0.0
  %1167 = vmatpush2.msra.mxu0 %v652
  %1168 = vmatprep.subr.mxu0 0.0
  %1169 = vmatpush2.msra.mxu0 %v651
  %1170 = vmatprep.subr.mxu0 0.0
  %1171 = vmatpush2.msra.mxu0 %v650
  %1172 = vmatprep.subr.mxu0 0.0
  %1173 = vmatpush2.msra.mxu0 %v649
  %1174 = vmatprep.subr.mxu0 0.0
  %1175 = vmatpush2.msra.mxu0 %v648
  %1176 = vmatprep.subr.mxu0 0.0
  %1177 = vmatpush2.msra.mxu0 %v647
  %1178 = vmatprep.subr.mxu0 0.0
  %1179 = vmatpush2.msra.mxu0 %v646
  %1180 = vmatprep.subr.mxu0 0.0
  %1181 = vmatpush2.msra.mxu0 %v645
  %1182 = vmatprep.subr.mxu0 0.0
  %1183 = vmatpush2.msra.mxu0 %v644
  %1184 = vmatprep.mubr.f32.mxu0 %v977
  %1185 = vmatmul.mubr.f32.gmra.mxu0 %v976
  %v1186 = vpop.f32.mrf.mxu0
  %v1187 = vadd.f32 %v1117, %v1186
  %v1188 = vpop.f32.mrf.mxu0
  %1189 = vdwg.mxu0
  %1190 = vmatprep.subr.mxu0 0.0
  %1191 = vmatpush1.msra.mxu0 %v675
  %1192 = vmatprep.subr.mxu0 0.0
  %1193 = vmatpush1.msra.mxu0 %v674
  %1194 = vmatprep.subr.mxu0 0.0
  %1195 = vmatpush1.msra.mxu0 %v673
  %1196 = vmatprep.subr.mxu0 0.0
  %1197 = vmatpush1.msra.mxu0 %v672
  %1198 = vmatprep.subr.mxu0 0.0
  %1199 = vmatpush1.msra.mxu0 %v671
  %1200 = vmatprep.subr.mxu0 0.0
  %1201 = vmatpush1.msra.mxu0 %v670
  %1202 = vmatprep.subr.mxu0 0.0
  %1203 = vmatpush1.msra.mxu0 %v669
  %1204 = vmatprep.subr.mxu0 0.0
  %1205 = vmatpush1.msra.mxu0 %v668
  %1206 = vmatprep.subr.mxu0 0.0
  %1207 = vmatpush1.msra.mxu0 %v667
  %1208 = vmatprep.subr.mxu0 0.0
  %1209 = vmatpush1.msra.mxu0 %v666
  %1210 = vmatprep.subr.mxu0 0.0
  %1211 = vmatpush1.msra.mxu0 %v665
  %1212 = vmatprep.subr.mxu0 0.0
  %1213 = vmatpush1.msra.mxu0 %v664
  %1214 = vmatprep.subr.mxu0 0.0
  %1215 = vmatpush1.msra.mxu0 %v663
  %1216 = vmatprep.subr.mxu0 0.0
  %1217 = vmatpush1.msra.mxu0 %v662
  %1218 = vmatprep.subr.mxu0 0.0
  %1219 = vmatpush1.msra.mxu0 %v661
  %1220 = vmatprep.subr.mxu0 0.0
  %1221 = vmatpush1.msra.mxu0 %v660
  %1222 = vmatprep.subr.mxu0 0.0
  %1223 = vmatpush2.msra.mxu0 %v691
  %1224 = vmatprep.subr.mxu0 0.0
  %1225 = vmatpush2.msra.mxu0 %v690
  %1226 = vmatprep.subr.mxu0 0.0
  %1227 = vmatpush2.msra.mxu0 %v689
  %1228 = vmatprep.subr.mxu0 0.0
  %1229 = vmatpush2.msra.mxu0 %v688
  %1230 = vmatprep.subr.mxu0 0.0
  %1231 = vmatpush2.msra.mxu0 %v687
  %1232 = vmatprep.subr.mxu0 0.0
  %1233 = vmatpush2.msra.mxu0 %v686
  %1234 = vmatprep.subr.mxu0 0.0
  %1235 = vmatpush2.msra.mxu0 %v685
  %1236 = vmatprep.subr.mxu0 0.0
  %1237 = vmatpush2.msra.mxu0 %v684
  %1238 = vmatprep.subr.mxu0 0.0
  %1239 = vmatpush2.msra.mxu0 %v683
  %1240 = vmatprep.subr.mxu0 0.0
  %1241 = vmatpush2.msra.mxu0 %v682
  %1242 = vmatprep.subr.mxu0 0.0
  %1243 = vmatpush2.msra.mxu0 %v681
  %1244 = vmatprep.subr.mxu0 0.0
  %1245 = vmatpush2.msra.mxu0 %v680
  %1246 = vmatprep.subr.mxu0 0.0
  %1247 = vmatpush2.msra.mxu0 %v679
  %1248 = vmatprep.subr.mxu0 0.0
  %1249 = vmatpush2.msra.mxu0 %v678
  %1250 = vmatprep.subr.mxu0 0.0
  %1251 = vmatpush2.msra.mxu0 %v677
  %1252 = vmatprep.subr.mxu0 0.0
  %1253 = vmatpush2.msra.mxu0 %v676
  %1254 = vmatprep.mubr.f32.mxu0 %v979
  %1255 = vmatmul.mubr.f32.gmra.mxu0 %v978
  %v1256 = vpop.f32.mrf.mxu0
  %v1257 = vadd.f32 %v1187, %v1256
  %v1258 = vpop.f32.mrf.mxu0
  %1259 = vdwg.mxu0
  %v1260 = vrot.slane %v969, 4
  %v1261 = vadd.f32 %v969, %v1260
  %v1262 = vrot.slane %v1261, 2
  %v1263 = vadd.f32 %v1261, %v1262
  %v1264 = vrot.slane %v1263, 1
  %v1265 = vadd.f32 %v1263, %v1264
  %1266 = vst [vmem:[%s3] sm:$0x1] %v1265
  %v1267 = vrot.slane %v1257, 4
  %v1268 = vadd.f32 %v1257, %v1267
  %v1269 = vrot.slane %v1268, 2
  %v1270 = vadd.f32 %v1268, %v1269
  %v1271 = vrot.slane %v1270, 1
  %v1272 = vadd.f32 %v1270, %v1271
  %1273 = vst [vmem:[%s3 + $0x1] sm:$0x1] %v1272
  // Predicated region
  $region14: #{up_layer_forward.2} parent=0 // pred_check
    _
  $region15: #{up_layer_forward.2} parent=0 // pred_check_branch
    %1275 = sbr.rel (0) target = $region17
  $region16: #{up_layer_forward.2} parent=0 // pred_region
    _
  $region17: #{up_layer_forward.2} parent=0 // pred_fallthru
    _
  // Predicated region
  $region18: #{up_layer_forward.2} parent=0 // pred_check
    _
  $region19: #{up_layer_forward.2} parent=0 // pred_check_branch
    %1277 = sbr.rel (0) target = $region21
  $region20: #{up_layer_forward.2} parent=0 // pred_region
    _
  $region21: #{up_layer_forward.2} parent=0 // pred_fallthru
    _

</llo_original>
